<compile_context>
chip_gen: v7x
topology: tpu7x:2x2x1
jax: 0.10.0
libtpu: 0.0.40
codegen_flags: <defaults>
</compile_context>

<pallas_src>
import functools

import jax
import jax.numpy as jnp
from jax.experimental import pallas as pl
from jax.experimental.pallas import tpu as pltpu


# ----------------------------------------------------------------------------
# Fused kernel: 3x (1x1 conv + bias + LeakyReLU)  ->  softmax attention
# ----------------------------------------------------------------------------
def _nonlocal_attn_kernel(x_ref, w_ref, b_ref, o_ref, *, channels, neg_slope):
    # x_ref: (1, HW, Cin) bf16   w_ref: (Cin, 3C) bf16   b_ref: (1, 3C) f32
    x = x_ref[0]                       # [HW, Cin] bf16
    w = w_ref[...]                     # [Cin, 3C] bf16

    # Three 1x1 convs as ONE pointwise matmul, fused affine + LeakyReLU(0.2).
    y = jnp.dot(x, w, preferred_element_type=jnp.float32)   # [HW, 3C] f32
    y = y + b_ref[...]
    y = jnp.where(y >= 0.0, y, neg_slope * y)

    c = channels
    e1 = y[:, 0 * c:1 * c].astype(jnp.bfloat16)   # "query"    [HW, C]
    e2 = y[:, 1 * c:2 * c].astype(jnp.bfloat16)   # "key"      [HW, C]
    asm = y[:, 2 * c:3 * c].astype(jnp.bfloat16)  # "value"    [HW, C]

    # score[i, j] = sum_c e1[i, c] * e2[j, c]   (contraction over channels)
    s = jax.lax.dot_general(e1, e2, (((1,), (1,)), ((), ())),
                            preferred_element_type=jnp.float32)  # [HW, HW]

    # softmax over the last dim (numerically-stable form; equivalent to
    # torch.nn.functional.softmax(score, dim=2)).
    s = s - jnp.max(s, axis=-1, keepdims=True)
    p = jnp.exp(s)
    p = p * pl.reciprocal(jnp.sum(p, axis=-1, keepdims=True))

    o = jnp.dot(p.astype(jnp.bfloat16), asm,
                preferred_element_type=jnp.float32)              # [HW, C]
    o_ref[0] = o.astype(o_ref.dtype)


# ----------------------------------------------------------------------------
# Wrapper: NCHW in / NCHW out, one pallas_call over the batch
# ----------------------------------------------------------------------------
def nonlocal_attention(x_nchw, w_cat, b_cat, *, neg_slope=0.2):
    """x_nchw: [N, C, H, W] f32. w_cat: [C, 3C] (conv1|conv2|conv3 as [Cin,Cout]).
    b_cat: [3C]. Returns [N, C, H, W] f32."""
    n, c, h, w = x_nchw.shape
    hw = h * w

    # Layout glue: NCHW -> [N, HW, C]; cast activations/weights to bf16 once.
    x_flat = jnp.transpose(x_nchw, (0, 2, 3, 1)).reshape(n, hw, c)
    x_flat = x_flat.astype(jnp.bfloat16)
    w_cat_b = w_cat.astype(jnp.bfloat16)
    b_row = b_cat.reshape(1, 3 * c).astype(jnp.float32)

    kernel = functools.partial(
        _nonlocal_attn_kernel, channels=c, neg_slope=neg_slope)

    out = pl.pallas_call(
        kernel,
        out_shape=jax.ShapeDtypeStruct((n, hw, c), jnp.float32),
        grid=(n,),
        in_specs=[
            pl.BlockSpec((1, hw, c), lambda b: (b, 0, 0)),     # x per batch
            pl.BlockSpec((c, 3 * c), lambda b: (0, 0)),        # fused weights
            pl.BlockSpec((1, 3 * c), lambda b: (0, 0)),        # fused biases
        ],
        out_specs=pl.BlockSpec((1, hw, c), lambda b: (b, 0, 0)),
        compiler_params=pltpu.CompilerParams(
            dimension_semantics=("parallel",)),
    )(x_flat, w_cat_b, b_row)

    # [N, HW, C] -> [N, H, W, C] -> [N, C, H, W]  (matches
    # .permute(0, 2, 1).view(n, -1, h, w) in the reference).
    return jnp.transpose(out.reshape(n, h, w, c), (0, 3, 1, 2))


# ----------------------------------------------------------------------------
# Deterministic synthetic parameters (shapes from NonLocalAttention.__init__)
# ----------------------------------------------------------------------------
def init_params(key, channels):
    kw, kb = jax.random.split(key)
    # Three 1x1 conv weights stored directly in [Cin, Cout] matmul form.
    w_all = (jax.random.normal(kw, (3, channels, channels), jnp.float32)
             / jnp.sqrt(jnp.float32(channels)))
    b_all = 0.01 * jax.random.normal(kb, (3, channels), jnp.float32)
    w_cat = jnp.concatenate([w_all[0], w_all[1], w_all[2]], axis=1)  # [C, 3C]
    b_cat = b_all.reshape(3 * channels)                              # [3C]
    return w_cat, b_cat


if __name__ == "__main__":
    key = jax.random.PRNGKey(0)
    kx, kp = jax.random.split(key)

    n, c, h, w = 2, 64, 16, 16          # module default channels=64
    x = jax.random.normal(kx, (n, c, h, w), jnp.float32)
    w_cat, b_cat = init_params(kp, c)

    fwd = jax.jit(lambda inp: nonlocal_attention(inp, w_cat, b_cat))
    out = jax.block_until_ready(fwd(x))

    assert out.shape == (n, c, h, w), out.shape
    assert bool(jnp.all(jnp.isfinite(out)))
    print("KERNEL_OK")
</pallas_src>

<mosaic_0001>
module attributes {stable_mosaic.version = 11 : i64} {
  func.func @_nonlocal_attn_kernel(%arg0: i32, %arg1: memref<1x256x64xbf16, #tpu.memory_space<vmem>>, %arg2: memref<64x192xbf16, #tpu.memory_space<vmem>>, %arg3: memref<1x192xf32, #tpu.memory_space<vmem>>, %arg4: memref<1x256x64xf32, #tpu.memory_space<vmem>>) attributes {dimension_semantics = [#tpu.dimension_semantics<parallel>], iteration_bounds = array<i64: 2>, scalar_prefetch = 0 : i64, scratch_operands = 0 : i64, tpu.core_type = #tpu.core_type<tc>, window_params = [{transform_indices = @transform_0, window_bounds = array<i64: 1, 256, 64>}, {pipeline_mode = #tpu.pipeline_mode<synchronous>, transform_indices = @transform_1, window_bounds = array<i64: 64, 192>}, {pipeline_mode = #tpu.pipeline_mode<synchronous>, transform_indices = @transform_2, window_bounds = array<i64: 1, 192>}, {transform_indices = @transform_3, window_bounds = array<i64: 1, 256, 64>}]} {
    %c0 = arith.constant 0 : index
    %c0_0 = arith.constant 0 : index
    %c0_1 = arith.constant 0 : index
    %0 = vector.load %arg1[%c0, %c0_0, %c0_1] : memref<1x256x64xbf16, #tpu.memory_space<vmem>>, vector<1x256x64xbf16>
    %1 = vector.shape_cast %0 : vector<1x256x64xbf16> to vector<256x64xbf16>
    %c0_2 = arith.constant 0 : index
    %c0_3 = arith.constant 0 : index
    %2 = vector.load %arg2[%c0_2, %c0_3] : memref<64x192xbf16, #tpu.memory_space<vmem>>, vector<64x192xbf16>
    %cst = arith.constant dense<0.000000e+00> : vector<256x192xf32>
    %3 = tpu.matmul %1, %2, %cst {dimension_numbers = #tpu.dot_dimension_numbers<[1], [0], [0], [1], [0, 0, 1, 1], [], []>} : vector<256x64xbf16>, vector<64x192xbf16>, vector<256x192xf32> -> vector<256x192xf32>
    %c0_4 = arith.constant 0 : index
    %c0_5 = arith.constant 0 : index
    %4 = vector.load %arg3[%c0_4, %c0_5] : memref<1x192xf32, #tpu.memory_space<vmem>>, vector<1x192xf32>
    %5 = vector.broadcast %4 : vector<1x192xf32> to vector<256x192xf32>
    %6 = arith.addf %3, %5 : vector<256x192xf32>
    %cst_6 = arith.constant 0.000000e+00 : f32
    %7 = vector.broadcast %cst_6 : f32 to vector<256x192xf32>
    %8 = arith.cmpf oge, %6, %7 : vector<256x192xf32>
    %cst_7 = arith.constant 2.000000e-01 : f32
    %9 = vector.broadcast %cst_7 : f32 to vector<256x192xf32>
    %10 = arith.mulf %9, %6 : vector<256x192xf32>
    %11 = arith.select %8, %6, %10 : vector<256x192xi1>, vector<256x192xf32>
    %12 = vector.extract_strided_slice %11 {offsets = [0, 0], sizes = [256, 64], strides = [1, 1]} : vector<256x192xf32> to vector<256x64xf32>
    %13 = arith.truncf %12 : vector<256x64xf32> to vector<256x64xbf16>
    %14 = vector.extract_strided_slice %11 {offsets = [0, 64], sizes = [256, 64], strides = [1, 1]} : vector<256x192xf32> to vector<256x64xf32>
    %15 = arith.truncf %14 : vector<256x64xf32> to vector<256x64xbf16>
    %16 = vector.extract_strided_slice %11 {offsets = [0, 128], sizes = [256, 64], strides = [1, 1]} : vector<256x192xf32> to vector<256x64xf32>
    %17 = arith.truncf %16 : vector<256x64xf32> to vector<256x64xbf16>
    %cst_8 = arith.constant dense<0.000000e+00> : vector<256x256xf32>
    %18 = tpu.matmul %13, %15, %cst_8 {dimension_numbers = #tpu.dot_dimension_numbers<[1], [1], [0], [0], [0, 0, 1, 0], [], []>} : vector<256x64xbf16>, vector<256x64xbf16>, vector<256x256xf32> -> vector<256x256xf32>
    %cst_9 = arith.constant dense<0xFF800000> : vector<256xf32>
    %19 = vector.multi_reduction <maximumf>, %18, %cst_9 [1] : vector<256x256xf32> to vector<256xf32>
    %20 = vector.shape_cast %19 : vector<256xf32> to vector<256x1xf32>
    %21 = vector.broadcast %20 : vector<256x1xf32> to vector<256x256xf32>
    %22 = arith.subf %18, %21 : vector<256x256xf32>
    %23 = math.exp %22 : vector<256x256xf32>
    %cst_10 = arith.constant dense<0.000000e+00> : vector<256xf32>
    %24 = vector.multi_reduction <add>, %23, %cst_10 [1] : vector<256x256xf32> to vector<256xf32>
    %25 = vector.shape_cast %24 : vector<256xf32> to vector<256x1xf32>
    %26 = tpu.reciprocal %25 : vector<256x1xf32> -> vector<256x1xf32>
    %27 = vector.broadcast %26 : vector<256x1xf32> to vector<256x256xf32>
    %28 = arith.mulf %23, %27 : vector<256x256xf32>
    %29 = arith.truncf %28 : vector<256x256xf32> to vector<256x256xbf16>
    %cst_11 = arith.constant dense<0.000000e+00> : vector<256x64xf32>
    %30 = tpu.matmul %29, %17, %cst_11 {dimension_numbers = #tpu.dot_dimension_numbers<[1], [0], [0], [1], [0, 0, 1, 1], [], []>} : vector<256x256xbf16>, vector<256x64xbf16>, vector<256x64xf32> -> vector<256x64xf32>
    %c0_12 = arith.constant 0 : index
    %c0_13 = arith.constant 0 : index
    %c0_14 = arith.constant 0 : index
    %31 = vector.load %arg4[%c0_12, %c0_13, %c0_14] : memref<1x256x64xf32, #tpu.memory_space<vmem>>, vector<1x256x64xf32>
    %32 = vector.shape_cast %31 : vector<1x256x64xf32> to vector<256x64xf32>
    %33 = vector.shape_cast %30 : vector<256x64xf32> to vector<1x256x64xf32>
    tpu.vector_store %arg4[%c0_12, %c0_13, %c0_14], %33 {strides = array<i32>} : memref<1x256x64xf32, #tpu.memory_space<vmem>>, vector<1x256x64xf32>,
    return
  }
  func.func @transform_0(%arg0: i32) -> (i32, i32, i32) {
    %c0_i32 = arith.constant 0 : i32
    %c0_i32_0 = arith.constant 0 : i32
    %c0_i32_1 = arith.constant 0 : i32
    return %arg0, %c0_i32, %c0_i32_0 : i32, i32, i32
  }
  func.func @transform_1(%arg0: i32) -> (i32, i32) {
    %c0_i32 = arith.constant 0 : i32
    %c0_i32_0 = arith.constant 0 : i32
    %c0_i32_1 = arith.constant 0 : i32
    return %c0_i32, %c0_i32_0 : i32, i32
  }
  func.func @transform_2(%arg0: i32) -> (i32, i32) {
    %c0_i32 = arith.constant 0 : i32
    %c0_i32_0 = arith.constant 0 : i32
    %c0_i32_1 = arith.constant 0 : i32
    return %c0_i32, %c0_i32_0 : i32, i32
  }
  func.func @transform_3(%arg0: i32) -> (i32, i32, i32) {
    %c0_i32 = arith.constant 0 : i32
    %c0_i32_0 = arith.constant 0 : i32
    %c0_i32_1 = arith.constant 0 : i32
    return %arg0, %c0_i32, %c0_i32_0 : i32, i32, i32
  }
}

</mosaic_0001>

<llo_original>
// kernel: _lambda_.1
$region0: #{_lambda_.1}
  #allocation0 [shape = 'u32[]', space=smem, size = 0x4, offset = 0x4, fixed_abs, tag = 'smem constant byte address 0x4 - core index']
  #allocation1 [shape = 'u32[144,128]{1,0:T(1,128)}', space=vmem, size = 0x12000, scoped, tag = 'internal scratch']
  %s0 = inlined_call_operand.vmem [shape: bf16[2,256,64], index: 0, kind: input, shape index: {}]
  %s1 = inlined_call_operand.vmem [shape: bf16[64,192], index: 1, kind: input, shape index: {}]
  %s2 = inlined_call_operand.vmem [shape: f32[1,192], index: 2, kind: input, shape index: {}]
  %s3 = inlined_call_operand.hbm [shape: f32[2,256,64], index: 3, kind: output, shape index: {}]
  %s4 = sld [smem:[#allocation0]]
  $region45: #{_lambda_.1} parent=0
    _
  %s6 = ssub.s32 1, %s4
  %s7 = scalar_select 0, %s6, %s4
  $region1: #{_lambda_.1} parent=0
    #allocation2 [shape = 'u8[262144]{0}', space=vmem, size = 0x40000, scoped, tag = 'output window, operand 0']
    #allocation3 [shape = 's32[2]{0}', space=sflag, size = 0x8, scoped, tag = 'scoped memory for _lambda_.1']
    %8 = vsyncpa [#allocation3], 0
    %s9 = scalar_lea.sflag [#allocation3], 1
    %10 = vsyncpa %s9, 0
    loop: start=0, step=1, limit=4
    $region2: #{_lambda_.1} parent=1 // loop_pre_header
      _
    $region3: #{_lambda_.1} parent=1 // loop_header
      %s12 = sphi 0, %s16
      %p13 = scmp.ge.s32.totalorder %s12, 4
      %s22 = sphi 0, %s24
      %s25 = sphi 0, %s22
      %s26 = sphi 0, %s25
      %s42 = sphi 0, %s26
      %s46 = sphi 0, %s46
      %s48 = sphi 0, %s46
      %s49 = sphi 0, %s48
      %s63 = sphi 0, %s49
      %s67 = sphi 0, %s67
      %s69 = sphi 0, %s67
      %s70 = sphi 0, %s69
      %s84 = sphi 0, %s70
      %s90 = sphi 0, %s92
      %s93 = sphi 0, %s90
      %s94 = sphi 0, %s93
      %s110 = sphi 0, %s94
    $region4: #{_lambda_.1} parent=1 // loop_header_branch
      %15 = sbr.rel (%p13) target = $region8
    $region5: #{_lambda_.1} parent=1 // loop_body
      %s17 = ssub.s32 %s12, 1
      %s18 = ssub.s32 %s12, 2
      %s19 = sadd.s32 %s12, 1
      %s20 = ssub.s32 %s12, %s19
      %p21 = scmp.eq.s32.totalorder %s20, 0
      %s23 = sadd.s32 %s22, 1
      %s24 = scalar_select %p21, %s22, %s23
      %p27 = pneg %p21
      %p28 = scmp.eq.s32.totalorder %s12, 1
      %p29 = por %p27, %p28
      %p30 = scmp.ne.s32.totalorder %s22, %s25
      %p31 = scmp.eq.s32.totalorder %s12, 0
      %p32 = por %p30, %p31
      %p33 = scmp.ne.s32.totalorder %s22, %s25
      %p34 = scmp.eq.s32.totalorder %s17, 1
      %p35 = por %p33, %p34
      %p36 = scmp.ne.s32.totalorder %s25, %s26
      %p37 = scmp.eq.s32.totalorder %s17, 0
      %p38 = por %p36, %p37
      %p39 = scmp.ne.s32.totalorder %s25, %s26
      %p40 = scmp.eq.s32.totalorder %s18, 1
      %p41 = por %p39, %p40
      %p43 = scmp.ne.s32.totalorder %s26, %s42
      %p44 = scmp.eq.s32.totalorder %s18, 0
      %p45 = por %p43, %p44
      %s47 = sadd.s32 %s46, 1
      %p50 = scmp.eq.s32.totalorder %s12, 1
      %p51 = scmp.ne.s32.totalorder %s46, %s48
      %p52 = scmp.eq.s32.totalorder %s12, 0
      %p53 = por %p51, %p52
      %p54 = scmp.ne.s32.totalorder %s46, %s48
      %p55 = scmp.eq.s32.totalorder %s17, 1
      %p56 = por %p54, %p55
      %p57 = scmp.ne.s32.totalorder %s48, %s49
      %p58 = scmp.eq.s32.totalorder %s17, 0
      %p59 = por %p57, %p58
      %p60 = scmp.ne.s32.totalorder %s48, %s49
      %p61 = scmp.eq.s32.totalorder %s18, 1
      %p62 = por %p60, %p61
      %p64 = scmp.ne.s32.totalorder %s49, %s63
      %p65 = scmp.eq.s32.totalorder %s18, 0
      %p66 = por %p64, %p65
      %s68 = sadd.s32 %s67, 1
      %p71 = scmp.eq.s32.totalorder %s12, 1
      %p72 = scmp.ne.s32.totalorder %s67, %s69
      %p73 = scmp.eq.s32.totalorder %s12, 0
      %p74 = por %p72, %p73
      %p75 = scmp.ne.s32.totalorder %s67, %s69
      %p76 = scmp.eq.s32.totalorder %s17, 1
      %p77 = por %p75, %p76
      %p78 = scmp.ne.s32.totalorder %s69, %s70
      %p79 = scmp.eq.s32.totalorder %s17, 0
      %p80 = por %p78, %p79
      %p81 = scmp.ne.s32.totalorder %s69, %s70
      %p82 = scmp.eq.s32.totalorder %s18, 1
      %p83 = por %p81, %p82
      %p85 = scmp.ne.s32.totalorder %s70, %s84
      %p86 = scmp.eq.s32.totalorder %s18, 0
      %p87 = por %p85, %p86
      %s88 = ssub.s32 %s12, %s19
      %p89 = scmp.eq.s32.totalorder %s88, 0
      %s91 = sadd.s32 %s90, 1
      %s92 = scalar_select %p89, %s90, %s91
      %p95 = pneg %p89
      %p96 = scmp.eq.s32.totalorder %s12, 1
      %p97 = por %p95, %p96
      %p98 = scmp.ne.s32.totalorder %s90, %s93
      %p99 = scmp.eq.s32.totalorder %s12, 0
      %p100 = por %p98, %p99
      %p101 = scmp.ne.s32.totalorder %s90, %s93
      %p102 = scmp.eq.s32.totalorder %s17, 1
      %p103 = por %p101, %p102
      %p104 = scmp.ne.s32.totalorder %s93, %s94
      %p105 = scmp.eq.s32.totalorder %s17, 0
      %p106 = por %p104, %p105
      %p107 = scmp.ne.s32.totalorder %s93, %s94
      %p108 = scmp.eq.s32.totalorder %s18, 1
      %p109 = por %p107, %p108
      %p111 = scmp.ne.s32.totalorder %s94, %s110
      %p112 = scmp.eq.s32.totalorder %s18, 0
      %p113 = por %p111, %p112
      %p114 = scmp.le.s32.totalorder 1, %s12
      %p115 = scmp.lt.s32.totalorder %s12, 3
      %p116 = pnand %p114, %p115
      %p117 = pneg %p116
      // Predicated region
      $region9: #{_lambda_.1} parent=5 // pred_check
        _
      $region10: #{_lambda_.1} parent=5 // pred_check_branch
        %119 = sbr.rel (%p116) target = $region12
      $region11: #{_lambda_.1} parent=5 // pred_region
        %s120 = ssub.s32 %s12, 1
        // Predicated region
        $region13: #{_lambda_.1} parent=11 // pred_check
          %p121 = pneg %p59
        $region14: #{_lambda_.1} parent=11 // pred_check_branch
          %123 = sbr.rel (%p121) target = $region16
        $region15: #{_lambda_.1} parent=11 // pred_region
          _
        $region16: #{_lambda_.1} parent=11 // pred_fallthru
          _
        // Predicated region
        $region17: #{_lambda_.1} parent=11 // pred_check
          %p124 = pneg %p80
        $region18: #{_lambda_.1} parent=11 // pred_check_branch
          %126 = sbr.rel (%p124) target = $region20
        $region19: #{_lambda_.1} parent=11 // pred_region
          _
        $region20: #{_lambda_.1} parent=11 // pred_fallthru
          _
      $region12: #{_lambda_.1} parent=5 // pred_fallthru
        _
      %p127 = scmp.lt.s32.totalorder %s12, 2
      // Predicated region
      $region21: #{_lambda_.1} parent=5 // pred_check
        %p128 = pneg %p127
      $region22: #{_lambda_.1} parent=5 // pred_check_branch
        %130 = sbr.rel (%p128) target = $region24
      $region23: #{_lambda_.1} parent=5 // pred_region
        // Predicated region
        $region25: #{_lambda_.1} parent=23 // pred_check
          %p131 = pneg %p32
        $region26: #{_lambda_.1} parent=23 // pred_check_branch
          %133 = sbr.rel (%p131) target = $region28
        $region27: #{_lambda_.1} parent=23 // pred_region
          %p134 = scmp.lt.s32.totalorder %s12, 1
          %s135 = scalar_select %p134, %s12, 1
          %s136 = smul.addr %s135, 32
          %s137 = smul.addr %s136, 4
          %s138 = scalar_lea.vmem %s0, %s137
        $region28: #{_lambda_.1} parent=23 // pred_fallthru
          _
      $region24: #{_lambda_.1} parent=5 // pred_fallthru
        _
      %p139 = scmp.le.s32.totalorder 1, %s12
      %p140 = scmp.lt.s32.totalorder %s12, 3
      %p141 = pnand %p139, %p140
      %p142 = pneg %p141
      // Predicated region
      $region29: #{_lambda_.1} parent=5 // pred_check
        _
      $region30: #{_lambda_.1} parent=5 // pred_check_branch
        %144 = sbr.rel (%p141) target = $region32
      $region31: #{_lambda_.1} parent=5 // pred_region
        %s145 = ssub.s32 %s12, 1
        %p146 = scmp.lt.s32.totalorder %s17, 1
        %s147 = scalar_select %p146, %s17, 1
        %s148 = smul.addr %s147, 32
        %s149 = smul.addr %s148, 4
        %s150 = scalar_lea.vmem %s0, %s149
        %p151 = pneg %p38
        %p152 = pneg %p35
        %p153 = pneg %p59
        %p154 = pneg %p56
        %p155 = pneg %p80
        %p156 = pneg %p77
        %p157 = pneg %p106
        %p158 = pneg %p103
        %s159 = sand.u32 %s93, 1
        %s160 = scalar_lea.sflag [#allocation3], %s159
        %s161 = sand.u32 %s93, 1
        %s162 = smul.addr %s161, 256
        %s163 = scalar_lea.vmem [#allocation2], %s162
        %p164 = scmp.lt.s32.totalorder %s17, 1
        %s165 = scalar_select %p164, %s17, 1
        %s166 = smul.addr %s165, 32
        %s167 = smul.addr %s166, 4
        %s168 = scalar_lea.vmem %s0, %s167
        %v170 = vld [vmem:[%s168] sm:$0xf]
        %v171 = vld [vmem:[%s168 + $0x4] sm:$0xf]
        %v172 = vld [vmem:[%s168 + $0x8] sm:$0xf]
        %v173 = vld [vmem:[%s168 + $0xc] sm:$0xf]
        %v174 = vld [vmem:[%s168 + $0x10] sm:$0xf]
        %v175 = vld [vmem:[%s168 + $0x14] sm:$0xf]
        %v176 = vld [vmem:[%s168 + $0x18] sm:$0xf]
        %v177 = vld [vmem:[%s168 + $0x1c] sm:$0xf]
        %v178 = vld [vmem:[%s168 + $0x20] sm:$0xf]
        %v179 = vld [vmem:[%s168 + $0x24] sm:$0xf]
        %v180 = vld [vmem:[%s168 + $0x28] sm:$0xf]
        %v181 = vld [vmem:[%s168 + $0x2c] sm:$0xf]
        %v182 = vld [vmem:[%s168 + $0x30] sm:$0xf]
        %v183 = vld [vmem:[%s168 + $0x34] sm:$0xf]
        %v184 = vld [vmem:[%s168 + $0x38] sm:$0xf]
        %v185 = vld [vmem:[%s168 + $0x3c] sm:$0xf]
        %v186 = vld [vmem:[%s168 + $0x40] sm:$0xf]
        %v187 = vld [vmem:[%s168 + $0x44] sm:$0xf]
        %v188 = vld [vmem:[%s168 + $0x48] sm:$0xf]
        %v189 = vld [vmem:[%s168 + $0x4c] sm:$0xf]
        %v190 = vld [vmem:[%s168 + $0x50] sm:$0xf]
        %v191 = vld [vmem:[%s168 + $0x54] sm:$0xf]
        %v192 = vld [vmem:[%s168 + $0x58] sm:$0xf]
        %v193 = vld [vmem:[%s168 + $0x5c] sm:$0xf]
        %v194 = vld [vmem:[%s168 + $0x60] sm:$0xf]
        %v195 = vld [vmem:[%s168 + $0x64] sm:$0xf]
        %v196 = vld [vmem:[%s168 + $0x68] sm:$0xf]
        %v197 = vld [vmem:[%s168 + $0x6c] sm:$0xf]
        %v198 = vld [vmem:[%s168 + $0x70] sm:$0xf]
        %v199 = vld [vmem:[%s168 + $0x74] sm:$0xf]
        %v200 = vld [vmem:[%s168 + $0x78] sm:$0xf]
        %v201 = vld [vmem:[%s168 + $0x7c] sm:$0xf]
        %v202 = vld [vmem:[%s1] sm:$0xff]
        %v203 = vld [vmem:[%s1 + $0x8] sm:$0xff]
        %v204 = vld [vmem:[%s1 + $0x10] sm:$0xff]
        %v205 = vld [vmem:[%s1 + $0x18] sm:$0xff]
        %v206 = vld [vmem:[%s1 + $0x20] sm:$0xff]
        %v207 = vld [vmem:[%s1 + $0x28] sm:$0xff]
        %v208 = vld [vmem:[%s1 + $0x30] sm:$0xff]
        %v209 = vld [vmem:[%s1 + $0x38] sm:$0xff]
        %v210 = vld [vmem:[%s2] sm:$0x3]
        %v212 = vlaneseq
        %v213 = vshrl.u32 %v212, 7
        %v214 = vsub.s32 0, %v213
        %v215 = vrot.slane %v210, %v214
        %v216 = vlaneseq
        %v217 = vshrl.u32 %v216, 7
        %v218 = vsub.s32 1, %v217
        %v219 = vrot.slane %v210, %v218
        %v254 = vunpack.c.l.b16 %v170
        %v255 = vunpack.c.l.b16 %v171
        %v256 = vunpack.c.l.b16 %v172
        %v257 = vunpack.c.l.b16 %v173
        %v258 = vunpack.c.l.b16 %v174
        %v259 = vunpack.c.l.b16 %v175
        %v260 = vunpack.c.l.b16 %v176
        %v261 = vunpack.c.l.b16 %v177
        %v262 = vunpack.c.l.b16 %v178
        %v263 = vunpack.c.l.b16 %v179
        %v264 = vunpack.c.l.b16 %v180
        %v265 = vunpack.c.l.b16 %v181
        %v266 = vunpack.c.l.b16 %v182
        %v267 = vunpack.c.l.b16 %v183
        %v268 = vunpack.c.l.b16 %v184
        %v269 = vunpack.c.l.b16 %v185
        %v270 = vunpack.c.l.b16 %v186
        %v271 = vunpack.c.l.b16 %v187
        %v272 = vunpack.c.l.b16 %v188
        %v273 = vunpack.c.l.b16 %v189
        %v274 = vunpack.c.l.b16 %v190
        %v275 = vunpack.c.l.b16 %v191
        %v276 = vunpack.c.l.b16 %v192
        %v277 = vunpack.c.l.b16 %v193
        %v278 = vunpack.c.l.b16 %v194
        %v279 = vunpack.c.l.b16 %v195
        %v280 = vunpack.c.l.b16 %v196
        %v281 = vunpack.c.l.b16 %v197
        %v282 = vunpack.c.l.b16 %v198
        %v283 = vunpack.c.l.b16 %v199
        %v284 = vunpack.c.l.b16 %v200
        %v285 = vunpack.c.l.b16 %v201
        %v286 = vpack.c.b16 %v255, %v254
        %v287 = vpack.c.b16 %v257, %v256
        %v288 = vpack.c.b16 %v259, %v258
        %v289 = vpack.c.b16 %v261, %v260
        %v290 = vpack.c.b16 %v263, %v262
        %v291 = vpack.c.b16 %v265, %v264
        %v292 = vpack.c.b16 %v267, %v266
        %v293 = vpack.c.b16 %v269, %v268
        %v294 = vpack.c.b16 %v271, %v270
        %v295 = vpack.c.b16 %v273, %v272
        %v296 = vpack.c.b16 %v275, %v274
        %v297 = vpack.c.b16 %v277, %v276
        %v298 = vpack.c.b16 %v279, %v278
        %v299 = vpack.c.b16 %v281, %v280
        %v300 = vpack.c.b16 %v283, %v282
        %v301 = vpack.c.b16 %v285, %v284
        %v310 = vunpack.c.l.b16 %v202
        %v311 = vunpack.c.h.b16 %v202
        %v312 = vunpack.c.l.b16 %v203
        %v313 = vunpack.c.h.b16 %v203
        %v314 = vunpack.c.l.b16 %v204
        %v315 = vunpack.c.h.b16 %v204
        %v316 = vunpack.c.l.b16 %v205
        %v317 = vunpack.c.h.b16 %v205
        %v318 = vunpack.c.l.b16 %v206
        %v319 = vunpack.c.h.b16 %v206
        %v320 = vunpack.c.l.b16 %v207
        %v321 = vunpack.c.h.b16 %v207
        %v322 = vunpack.c.l.b16 %v208
        %v323 = vunpack.c.h.b16 %v208
        %v324 = vunpack.c.l.b16 %v209
        %v325 = vunpack.c.h.b16 %v209
        %v326 = vpack.c.b16 %v312, %v310
        %v327 = vpack.c.b16 %v313, %v311
        %v328 = vpack.c.b16 %v316, %v314
        %v329 = vpack.c.b16 %v317, %v315
        %v330 = vpack.c.b16 %v320, %v318
        %v331 = vpack.c.b16 %v321, %v319
        %v332 = vpack.c.b16 %v324, %v322
        %v333 = vpack.c.b16 %v325, %v323
        %vm342 = vcmask 523264
        %v344 = vsel %vm342, %v286, 0
        %v347 = vsel %vm342, %v287, 0
        %v350 = vsel %vm342, %v288, 0
        %v353 = vsel %vm342, %v289, 0
        %v356 = vsel %vm342, %v290, 0
        %v359 = vsel %vm342, %v291, 0
        %v362 = vsel %vm342, %v292, 0
        %v365 = vsel %vm342, %v293, 0
        %v368 = vsel %vm342, %v294, 0
        %v371 = vsel %vm342, %v295, 0
        %v374 = vsel %vm342, %v296, 0
        %v377 = vsel %vm342, %v297, 0
        %v380 = vsel %vm342, %v298, 0
        %v383 = vsel %vm342, %v299, 0
        %v386 = vsel %vm342, %v300, 0
        %v389 = vsel %vm342, %v301, 0
        %391 = vmatprep.subr.bf16.mxu0 %v327
        %392 = vmatpush1.bf16.msra.mxu0 %v326
        %393 = vmatprep.subr.bf16.mxu0 %v329
        %394 = vmatpush1.bf16.msra.mxu0 %v328
        %395 = vmatprep.subr.bf16.mxu0 %v331
        %396 = vmatpush1.bf16.msra.mxu0 %v330
        %397 = vmatprep.subr.bf16.mxu0 %v333
        %398 = vmatpush1.bf16.msra.mxu0 %v332
        %399 = vmatprep.subr.bf16.mxu0 0
        %400 = vmatpush1.bf16.msra.mxu0 0
        %401 = vmatprep.subr.bf16.mxu0 0
        %402 = vmatpush1.bf16.msra.mxu0 0
        %403 = vmatprep.subr.bf16.mxu0 0
        %404 = vmatpush1.bf16.msra.mxu0 0
        %405 = vmatprep.subr.bf16.mxu0 0
        %406 = vmatpush1.bf16.msra.mxu0 0
        %407 = vmatprep.subr.bf16.mxu0 0
        %408 = vmatpush1.bf16.msra.mxu0 0
        %409 = vmatprep.subr.bf16.mxu0 0
        %410 = vmatpush1.bf16.msra.mxu0 0
        %411 = vmatprep.subr.bf16.mxu0 0
        %412 = vmatpush1.bf16.msra.mxu0 0
        %413 = vmatprep.subr.bf16.mxu0 0
        %414 = vmatpush1.bf16.msra.mxu0 0
        %415 = vmatprep.subr.bf16.mxu0 0
        %416 = vmatpush1.bf16.msra.mxu0 0
        %417 = vmatprep.subr.bf16.mxu0 0
        %418 = vmatpush1.bf16.msra.mxu0 0
        %419 = vmatprep.subr.bf16.mxu0 0
        %420 = vmatpush1.bf16.msra.mxu0 0
        %421 = vmatprep.subr.bf16.mxu0 0
        %422 = vmatpush1.bf16.msra.mxu0 0
        %423 = vmatprep.mubr.bf16.mxu0 0
        %424 = vmatmul.mubr.bf16.gmra.mrb[0].mxu0 %v344
        %v425 = vpop.f32.mrb[0].mxu0
        %v426 = vadd.f32 %v215, %v425
        %v427 = vpop.f32.mrb[0].mxu0
        %v428 = vadd.f32 %v219, %v427
        %v429 = vpop.f32.mrb[0].mxu0
        %v430 = vadd.f32 %v215, %v429
        %v431 = vpop.f32.mrb[0].mxu0
        %v432 = vadd.f32 %v219, %v431
        %433 = vmatprep.mubr.bf16.mxu0 0
        %434 = vmatmul.mubr.bf16.gmra.mrb[0].mxu0 %v347
        %v435 = vpop.f32.mrb[0].mxu0
        %v436 = vadd.f32 %v215, %v435
        %v437 = vpop.f32.mrb[0].mxu0
        %v438 = vadd.f32 %v219, %v437
        %v439 = vpop.f32.mrb[0].mxu0
        %v440 = vadd.f32 %v215, %v439
        %v441 = vpop.f32.mrb[0].mxu0
        %v442 = vadd.f32 %v219, %v441
        %443 = vmatprep.mubr.bf16.mxu0 0
        %444 = vmatmul.mubr.bf16.gmra.mrb[0].mxu0 %v350
        %v445 = vpop.f32.mrb[0].mxu0
        %v446 = vadd.f32 %v215, %v445
        %v447 = vpop.f32.mrb[0].mxu0
        %v448 = vadd.f32 %v219, %v447
        %v449 = vpop.f32.mrb[0].mxu0
        %v450 = vadd.f32 %v215, %v449
        %v451 = vpop.f32.mrb[0].mxu0
        %v452 = vadd.f32 %v219, %v451
        %453 = vmatprep.mubr.bf16.mxu0 0
        %454 = vmatmul.mubr.bf16.gmra.mrb[0].mxu0 %v353
        %v455 = vpop.f32.mrb[0].mxu0
        %v456 = vadd.f32 %v215, %v455
        %v457 = vpop.f32.mrb[0].mxu0
        %v458 = vadd.f32 %v219, %v457
        %v459 = vpop.f32.mrb[0].mxu0
        %v460 = vadd.f32 %v215, %v459
        %v461 = vpop.f32.mrb[0].mxu0
        %v462 = vadd.f32 %v219, %v461
        %463 = vmatprep.mubr.bf16.mxu0 0
        %464 = vmatmul.mubr.bf16.gmra.mrb[0].mxu0 %v356
        %v465 = vpop.f32.mrb[0].mxu0
        %v466 = vadd.f32 %v215, %v465
        %v467 = vpop.f32.mrb[0].mxu0
        %v468 = vadd.f32 %v219, %v467
        %v469 = vpop.f32.mrb[0].mxu0
        %v470 = vadd.f32 %v215, %v469
        %v471 = vpop.f32.mrb[0].mxu0
        %v472 = vadd.f32 %v219, %v471
        %473 = vmatprep.mubr.bf16.mxu0 0
        %474 = vmatmul.mubr.bf16.gmra.mrb[0].mxu0 %v359
        %v475 = vpop.f32.mrb[0].mxu0
        %v476 = vadd.f32 %v215, %v475
        %v477 = vpop.f32.mrb[0].mxu0
        %v478 = vadd.f32 %v219, %v477
        %v479 = vpop.f32.mrb[0].mxu0
        %v480 = vadd.f32 %v215, %v479
        %v481 = vpop.f32.mrb[0].mxu0
        %v482 = vadd.f32 %v219, %v481
        %483 = vmatprep.mubr.bf16.mxu0 0
        %484 = vmatmul.mubr.bf16.gmra.mrb[0].mxu0 %v362
        %v485 = vpop.f32.mrb[0].mxu0
        %v486 = vadd.f32 %v215, %v485
        %v487 = vpop.f32.mrb[0].mxu0
        %v488 = vadd.f32 %v219, %v487
        %v489 = vpop.f32.mrb[0].mxu0
        %v490 = vadd.f32 %v215, %v489
        %v491 = vpop.f32.mrb[0].mxu0
        %v492 = vadd.f32 %v219, %v491
        %493 = vmatprep.mubr.bf16.mxu0 0
        %494 = vmatmul.mubr.bf16.gmra.mrb[0].mxu0 %v365
        %v495 = vpop.f32.mrb[0].mxu0
        %v496 = vadd.f32 %v215, %v495
        %v497 = vpop.f32.mrb[0].mxu0
        %v498 = vadd.f32 %v219, %v497
        %v499 = vpop.f32.mrb[0].mxu0
        %v500 = vadd.f32 %v215, %v499
        %v501 = vpop.f32.mrb[0].mxu0
        %v502 = vadd.f32 %v219, %v501
        %503 = vmatprep.mubr.bf16.mxu0 0
        %504 = vmatmul.mubr.bf16.gmra.mrb[0].mxu0 %v368
        %v505 = vpop.f32.mrb[0].mxu0
        %v506 = vadd.f32 %v215, %v505
        %v507 = vpop.f32.mrb[0].mxu0
        %v508 = vadd.f32 %v219, %v507
        %v509 = vpop.f32.mrb[0].mxu0
        %v510 = vadd.f32 %v215, %v509
        %v511 = vpop.f32.mrb[0].mxu0
        %v512 = vadd.f32 %v219, %v511
        %513 = vmatprep.mubr.bf16.mxu0 0
        %514 = vmatmul.mubr.bf16.gmra.mrb[0].mxu0 %v371
        %v515 = vpop.f32.mrb[0].mxu0
        %v516 = vadd.f32 %v215, %v515
        %v517 = vpop.f32.mrb[0].mxu0
        %v518 = vadd.f32 %v219, %v517
        %v519 = vpop.f32.mrb[0].mxu0
        %v520 = vadd.f32 %v215, %v519
        %v521 = vpop.f32.mrb[0].mxu0
        %v522 = vadd.f32 %v219, %v521
        %523 = vmatprep.mubr.bf16.mxu0 0
        %524 = vmatmul.mubr.bf16.gmra.mrb[0].mxu0 %v374
        %v525 = vpop.f32.mrb[0].mxu0
        %v526 = vadd.f32 %v215, %v525
        %v527 = vpop.f32.mrb[0].mxu0
        %v528 = vadd.f32 %v219, %v527
        %v529 = vpop.f32.mrb[0].mxu0
        %v530 = vadd.f32 %v215, %v529
        %v531 = vpop.f32.mrb[0].mxu0
        %v532 = vadd.f32 %v219, %v531
        %533 = vmatprep.mubr.bf16.mxu0 0
        %534 = vmatmul.mubr.bf16.gmra.mrb[0].mxu0 %v377
        %v535 = vpop.f32.mrb[0].mxu0
        %v536 = vadd.f32 %v215, %v535
        %v537 = vpop.f32.mrb[0].mxu0
        %v538 = vadd.f32 %v219, %v537
        %v539 = vpop.f32.mrb[0].mxu0
        %v540 = vadd.f32 %v215, %v539
        %v541 = vpop.f32.mrb[0].mxu0
        %v542 = vadd.f32 %v219, %v541
        %543 = vmatprep.mubr.bf16.mxu0 0
        %544 = vmatmul.mubr.bf16.gmra.mrb[0].mxu0 %v380
        %v545 = vpop.f32.mrb[0].mxu0
        %v546 = vadd.f32 %v215, %v545
        %v547 = vpop.f32.mrb[0].mxu0
        %v548 = vadd.f32 %v219, %v547
        %v549 = vpop.f32.mrb[0].mxu0
        %v550 = vadd.f32 %v215, %v549
        %v551 = vpop.f32.mrb[0].mxu0
        %v552 = vadd.f32 %v219, %v551
        %553 = vmatprep.mubr.bf16.mxu0 0
        %554 = vmatmul.mubr.bf16.gmra.mrb[0].mxu0 %v383
        %v555 = vpop.f32.mrb[0].mxu0
        %v556 = vadd.f32 %v215, %v555
        %v557 = vpop.f32.mrb[0].mxu0
        %v558 = vadd.f32 %v219, %v557
        %v559 = vpop.f32.mrb[0].mxu0
        %v560 = vadd.f32 %v215, %v559
        %v561 = vpop.f32.mrb[0].mxu0
        %v562 = vadd.f32 %v219, %v561
        %563 = vmatprep.mubr.bf16.mxu0 0
        %564 = vmatmul.mubr.bf16.gmra.mrb[0].mxu0 %v386
        %v565 = vpop.f32.mrb[0].mxu0
        %v566 = vadd.f32 %v215, %v565
        %v567 = vpop.f32.mrb[0].mxu0
        %v568 = vadd.f32 %v219, %v567
        %v569 = vpop.f32.mrb[0].mxu0
        %v570 = vadd.f32 %v215, %v569
        %v571 = vpop.f32.mrb[0].mxu0
        %v572 = vadd.f32 %v219, %v571
        %573 = vmatprep.mubr.bf16.mxu0 0
        %574 = vmatmul.mubr.bf16.gmra.mrb[0].mxu0 %v389
        %v575 = vpop.f32.mrb[0].mxu0
        %v576 = vadd.f32 %v215, %v575
        %v577 = vpop.f32.mrb[0].mxu0
        %v578 = vadd.f32 %v219, %v577
        %v579 = vpop.f32.mrb[0].mxu0
        %v580 = vadd.f32 %v215, %v579
        %v581 = vpop.f32.mrb[0].mxu0
        %v582 = vadd.f32 %v219, %v581
        %583 = vdwg.mxu0
        %vm584 = vcmp.ge.f32.partialorder %v426, 0.0
        %vm585 = vcmp.ge.f32.partialorder %v428, 0.0
        %vm586 = vcmp.ge.f32.partialorder %v430, 0.0
        %vm587 = vcmp.ge.f32.partialorder %v432, 0.0
        %vm588 = vcmp.ge.f32.partialorder %v436, 0.0
        %vm589 = vcmp.ge.f32.partialorder %v438, 0.0
        %vm590 = vcmp.ge.f32.partialorder %v440, 0.0
        %vm591 = vcmp.ge.f32.partialorder %v442, 0.0
        %vm592 = vcmp.ge.f32.partialorder %v446, 0.0
        %vm593 = vcmp.ge.f32.partialorder %v448, 0.0
        %vm594 = vcmp.ge.f32.partialorder %v450, 0.0
        %vm595 = vcmp.ge.f32.partialorder %v452, 0.0
        %vm596 = vcmp.ge.f32.partialorder %v456, 0.0
        %vm597 = vcmp.ge.f32.partialorder %v458, 0.0
        %vm598 = vcmp.ge.f32.partialorder %v460, 0.0
        %vm599 = vcmp.ge.f32.partialorder %v462, 0.0
        %vm600 = vcmp.ge.f32.partialorder %v466, 0.0
        %vm601 = vcmp.ge.f32.partialorder %v468, 0.0
        %vm602 = vcmp.ge.f32.partialorder %v470, 0.0
        %vm603 = vcmp.ge.f32.partialorder %v472, 0.0
        %vm604 = vcmp.ge.f32.partialorder %v476, 0.0
        %vm605 = vcmp.ge.f32.partialorder %v478, 0.0
        %vm606 = vcmp.ge.f32.partialorder %v480, 0.0
        %vm607 = vcmp.ge.f32.partialorder %v482, 0.0
        %vm608 = vcmp.ge.f32.partialorder %v486, 0.0
        %vm609 = vcmp.ge.f32.partialorder %v488, 0.0
        %vm610 = vcmp.ge.f32.partialorder %v490, 0.0
        %vm611 = vcmp.ge.f32.partialorder %v492, 0.0
        %vm612 = vcmp.ge.f32.partialorder %v496, 0.0
        %vm613 = vcmp.ge.f32.partialorder %v498, 0.0
        %vm614 = vcmp.ge.f32.partialorder %v500, 0.0
        %vm615 = vcmp.ge.f32.partialorder %v502, 0.0
        %vm616 = vcmp.ge.f32.partialorder %v506, 0.0
        %vm617 = vcmp.ge.f32.partialorder %v508, 0.0
        %vm618 = vcmp.ge.f32.partialorder %v510, 0.0
        %vm619 = vcmp.ge.f32.partialorder %v512, 0.0
        %vm620 = vcmp.ge.f32.partialorder %v516, 0.0
        %vm621 = vcmp.ge.f32.partialorder %v518, 0.0
        %vm622 = vcmp.ge.f32.partialorder %v520, 0.0
        %vm623 = vcmp.ge.f32.partialorder %v522, 0.0
        %vm624 = vcmp.ge.f32.partialorder %v526, 0.0
        %vm625 = vcmp.ge.f32.partialorder %v528, 0.0
        %vm626 = vcmp.ge.f32.partialorder %v530, 0.0
        %vm627 = vcmp.ge.f32.partialorder %v532, 0.0
        %vm628 = vcmp.ge.f32.partialorder %v536, 0.0
        %vm629 = vcmp.ge.f32.partialorder %v538, 0.0
        %vm630 = vcmp.ge.f32.partialorder %v540, 0.0
        %vm631 = vcmp.ge.f32.partialorder %v542, 0.0
        %vm632 = vcmp.ge.f32.partialorder %v546, 0.0
        %vm633 = vcmp.ge.f32.partialorder %v548, 0.0
        %vm634 = vcmp.ge.f32.partialorder %v550, 0.0
        %vm635 = vcmp.ge.f32.partialorder %v552, 0.0
        %vm636 = vcmp.ge.f32.partialorder %v556, 0.0
        %vm637 = vcmp.ge.f32.partialorder %v558, 0.0
        %vm638 = vcmp.ge.f32.partialorder %v560, 0.0
        %vm639 = vcmp.ge.f32.partialorder %v562, 0.0
        %vm640 = vcmp.ge.f32.partialorder %v566, 0.0
        %vm641 = vcmp.ge.f32.partialorder %v568, 0.0
        %vm642 = vcmp.ge.f32.partialorder %v570, 0.0
        %vm643 = vcmp.ge.f32.partialorder %v572, 0.0
        %vm644 = vcmp.ge.f32.partialorder %v576, 0.0
        %vm645 = vcmp.ge.f32.partialorder %v578, 0.0
        %vm646 = vcmp.ge.f32.partialorder %v580, 0.0
        %vm647 = vcmp.ge.f32.partialorder %v582, 0.0
        %v648 = vmul.f32 %v426, 0.2
        %v649 = vmul.f32 %v428, 0.2
        %v650 = vmul.f32 %v430, 0.2
        %v651 = vmul.f32 %v432, 0.2
        %v652 = vmul.f32 %v436, 0.2
        %v653 = vmul.f32 %v438, 0.2
        %v654 = vmul.f32 %v440, 0.2
        %v655 = vmul.f32 %v442, 0.2
        %v656 = vmul.f32 %v446, 0.2
        %v657 = vmul.f32 %v448, 0.2
        %v658 = vmul.f32 %v450, 0.2
        %v659 = vmul.f32 %v452, 0.2
        %v660 = vmul.f32 %v456, 0.2
        %v661 = vmul.f32 %v458, 0.2
        %v662 = vmul.f32 %v460, 0.2
        %v663 = vmul.f32 %v462, 0.2
        %v664 = vmul.f32 %v466, 0.2
        %v665 = vmul.f32 %v468, 0.2
        %v666 = vmul.f32 %v470, 0.2
        %v667 = vmul.f32 %v472, 0.2
        %v668 = vmul.f32 %v476, 0.2
        %v669 = vmul.f32 %v478, 0.2
        %v670 = vmul.f32 %v480, 0.2
        %v671 = vmul.f32 %v482, 0.2
        %v672 = vmul.f32 %v486, 0.2
        %v673 = vmul.f32 %v488, 0.2
        %v674 = vmul.f32 %v490, 0.2
        %v675 = vmul.f32 %v492, 0.2
        %v676 = vmul.f32 %v496, 0.2
        %v677 = vmul.f32 %v498, 0.2
        %v678 = vmul.f32 %v500, 0.2
        %v679 = vmul.f32 %v502, 0.2
        %v680 = vmul.f32 %v506, 0.2
        %v681 = vmul.f32 %v508, 0.2
        %v682 = vmul.f32 %v510, 0.2
        %v683 = vmul.f32 %v512, 0.2
        %v684 = vmul.f32 %v516, 0.2
        %v685 = vmul.f32 %v518, 0.2
        %v686 = vmul.f32 %v520, 0.2
        %v687 = vmul.f32 %v522, 0.2
        %v688 = vmul.f32 %v526, 0.2
        %v689 = vmul.f32 %v528, 0.2
        %v690 = vmul.f32 %v530, 0.2
        %v691 = vmul.f32 %v532, 0.2
        %v692 = vmul.f32 %v536, 0.2
        %v693 = vmul.f32 %v538, 0.2
        %v694 = vmul.f32 %v540, 0.2
        %v695 = vmul.f32 %v542, 0.2
        %v696 = vmul.f32 %v546, 0.2
        %v697 = vmul.f32 %v548, 0.2
        %v698 = vmul.f32 %v550, 0.2
        %v699 = vmul.f32 %v552, 0.2
        %v700 = vmul.f32 %v556, 0.2
        %v701 = vmul.f32 %v558, 0.2
        %v702 = vmul.f32 %v560, 0.2
        %v703 = vmul.f32 %v562, 0.2
        %v704 = vmul.f32 %v566, 0.2
        %v705 = vmul.f32 %v568, 0.2
        %v706 = vmul.f32 %v570, 0.2
        %v707 = vmul.f32 %v572, 0.2
        %v708 = vmul.f32 %v576, 0.2
        %v709 = vmul.f32 %v578, 0.2
        %v710 = vmul.f32 %v580, 0.2
        %v711 = vmul.f32 %v582, 0.2
        %v712 = vsel %vm584, %v426, %v648
        %v713 = vsel %vm585, %v428, %v649
        %v714 = vsel %vm586, %v430, %v650
        %v715 = vsel %vm587, %v432, %v651
        %v716 = vsel %vm588, %v436, %v652
        %v717 = vsel %vm589, %v438, %v653
        %v718 = vsel %vm590, %v440, %v654
        %v719 = vsel %vm591, %v442, %v655
        %v720 = vsel %vm592, %v446, %v656
        %v721 = vsel %vm593, %v448, %v657
        %v722 = vsel %vm594, %v450, %v658
        %v723 = vsel %vm595, %v452, %v659
        %v724 = vsel %vm596, %v456, %v660
        %v725 = vsel %vm597, %v458, %v661
        %v726 = vsel %vm598, %v460, %v662
        %v727 = vsel %vm599, %v462, %v663
        %v728 = vsel %vm600, %v466, %v664
        %v729 = vsel %vm601, %v468, %v665
        %v730 = vsel %vm602, %v470, %v666
        %v731 = vsel %vm603, %v472, %v667
        %v732 = vsel %vm604, %v476, %v668
        %v733 = vsel %vm605, %v478, %v669
        %v734 = vsel %vm606, %v480, %v670
        %v735 = vsel %vm607, %v482, %v671
        %v736 = vsel %vm608, %v486, %v672
        %v737 = vsel %vm609, %v488, %v673
        %v738 = vsel %vm610, %v490, %v674
        %v739 = vsel %vm611, %v492, %v675
        %v740 = vsel %vm612, %v496, %v676
        %v741 = vsel %vm613, %v498, %v677
        %v742 = vsel %vm614, %v500, %v678
        %v743 = vsel %vm615, %v502, %v679
        %v744 = vsel %vm616, %v506, %v680
        %v745 = vsel %vm617, %v508, %v681
        %v746 = vsel %vm618, %v510, %v682
        %v747 = vsel %vm619, %v512, %v683
        %v748 = vsel %vm620, %v516, %v684
        %v749 = vsel %vm621, %v518, %v685
        %v750 = vsel %vm622, %v520, %v686
        %v751 = vsel %vm623, %v522, %v687
        %v752 = vsel %vm624, %v526, %v688
        %v753 = vsel %vm625, %v528, %v689
        %v754 = vsel %vm626, %v530, %v690
        %v755 = vsel %vm627, %v532, %v691
        %v756 = vsel %vm628, %v536, %v692
        %v757 = vsel %vm629, %v538, %v693
        %v758 = vsel %vm630, %v540, %v694
        %v759 = vsel %vm631, %v542, %v695
        %v760 = vsel %vm632, %v546, %v696
        %v761 = vsel %vm633, %v548, %v697
        %v762 = vsel %vm634, %v550, %v698
        %v763 = vsel %vm635, %v552, %v699
        %v764 = vsel %vm636, %v556, %v700
        %v765 = vsel %vm637, %v558, %v701
        %v766 = vsel %vm638, %v560, %v702
        %v767 = vsel %vm639, %v562, %v703
        %v768 = vsel %vm640, %v566, %v704
        %v769 = vsel %vm641, %v568, %v705
        %v770 = vsel %vm642, %v570, %v706
        %v771 = vsel %vm643, %v572, %v707
        %v772 = vsel %vm644, %v576, %v708
        %v773 = vsel %vm645, %v578, %v709
        %v774 = vsel %vm646, %v580, %v710
        %v775 = vsel %vm647, %v582, %v711
        %v776 = vpack.c.bf16 %v714, %v712
        %v777 = vpack.c.bf16 %v718, %v716
        %v778 = vpack.c.bf16 %v722, %v720
        %v779 = vpack.c.bf16 %v726, %v724
        %v780 = vpack.c.bf16 %v730, %v728
        %v781 = vpack.c.bf16 %v734, %v732
        %v782 = vpack.c.bf16 %v738, %v736
        %v783 = vpack.c.bf16 %v742, %v740
        %v784 = vpack.c.bf16 %v746, %v744
        %v785 = vpack.c.bf16 %v750, %v748
        %v786 = vpack.c.bf16 %v754, %v752
        %v787 = vpack.c.bf16 %v758, %v756
        %v788 = vpack.c.bf16 %v762, %v760
        %v789 = vpack.c.bf16 %v766, %v764
        %v790 = vpack.c.bf16 %v770, %v768
        %v791 = vpack.c.bf16 %v774, %v772
        %v792 = vpack.c.bf16 %v715, %v713
        %v793 = vpack.c.bf16 %v719, %v717
        %v794 = vpack.c.bf16 %v723, %v721
        %v795 = vpack.c.bf16 %v727, %v725
        %v796 = vpack.c.bf16 %v731, %v729
        %v797 = vpack.c.bf16 %v735, %v733
        %v798 = vpack.c.bf16 %v739, %v737
        %v799 = vpack.c.bf16 %v743, %v741
        %v800 = vpack.c.bf16 %v747, %v745
        %v801 = vpack.c.bf16 %v751, %v749
        %v802 = vpack.c.bf16 %v755, %v753
        %v803 = vpack.c.bf16 %v759, %v757
        %v804 = vpack.c.bf16 %v763, %v761
        %v805 = vpack.c.bf16 %v767, %v765
        %v806 = vpack.c.bf16 %v771, %v769
        %v807 = vpack.c.bf16 %v775, %v773
        %824 = vrot.lane.b32.xlu0 %v776, 64
        %v825 = vpop.permute.xlu0 %824
        %826 = vrot.lane.b32.xlu0 %v777, 64
        %v827 = vpop.permute.xlu0 %826
        %828 = vrot.lane.b32.xlu0 %v778, 64
        %v829 = vpop.permute.xlu0 %828
        %830 = vrot.lane.b32.xlu0 %v779, 64
        %v831 = vpop.permute.xlu0 %830
        %832 = vrot.lane.b32.xlu0 %v780, 64
        %v833 = vpop.permute.xlu0 %832
        %834 = vrot.lane.b32.xlu0 %v781, 64
        %v835 = vpop.permute.xlu0 %834
        %836 = vrot.lane.b32.xlu0 %v782, 64
        %v837 = vpop.permute.xlu0 %836
        %838 = vrot.lane.b32.xlu0 %v783, 64
        %v839 = vpop.permute.xlu0 %838
        %840 = vrot.lane.b32.xlu0 %v784, 64
        %v841 = vpop.permute.xlu0 %840
        %842 = vrot.lane.b32.xlu0 %v785, 64
        %v843 = vpop.permute.xlu0 %842
        %844 = vrot.lane.b32.xlu0 %v786, 64
        %v845 = vpop.permute.xlu0 %844
        %846 = vrot.lane.b32.xlu0 %v787, 64
        %v847 = vpop.permute.xlu0 %846
        %848 = vrot.lane.b32.xlu0 %v788, 64
        %v849 = vpop.permute.xlu0 %848
        %850 = vrot.lane.b32.xlu0 %v789, 64
        %v851 = vpop.permute.xlu0 %850
        %852 = vrot.lane.b32.xlu0 %v790, 64
        %v853 = vpop.permute.xlu0 %852
        %854 = vrot.lane.b32.xlu0 %v791, 64
        %v855 = vpop.permute.xlu0 %854
        %v857 = vsel %vm342, %v776, 0
        %v860 = vsel %vm342, %v777, 0
        %v863 = vsel %vm342, %v778, 0
        %v866 = vsel %vm342, %v779, 0
        %v869 = vsel %vm342, %v780, 0
        %v872 = vsel %vm342, %v781, 0
        %v875 = vsel %vm342, %v782, 0
        %v878 = vsel %vm342, %v783, 0
        %v881 = vsel %vm342, %v784, 0
        %v884 = vsel %vm342, %v785, 0
        %v887 = vsel %vm342, %v786, 0
        %v890 = vsel %vm342, %v787, 0
        %v893 = vsel %vm342, %v788, 0
        %v896 = vsel %vm342, %v789, 0
        %v899 = vsel %vm342, %v790, 0
        %v902 = vsel %vm342, %v791, 0
        %v905 = vsel %vm342, %v825, 0
        %v908 = vsel %vm342, %v827, 0
        %v911 = vsel %vm342, %v829, 0
        %v914 = vsel %vm342, %v831, 0
        %v917 = vsel %vm342, %v833, 0
        %v920 = vsel %vm342, %v835, 0
        %v923 = vsel %vm342, %v837, 0
        %v926 = vsel %vm342, %v839, 0
        %v929 = vsel %vm342, %v841, 0
        %v932 = vsel %vm342, %v843, 0
        %v935 = vsel %vm342, %v845, 0
        %v938 = vsel %vm342, %v847, 0
        %v941 = vsel %vm342, %v849, 0
        %v944 = vsel %vm342, %v851, 0
        %v947 = vsel %vm342, %v853, 0
        %v950 = vsel %vm342, %v855, 0
        %952 = vmatprep.subr.bf16.mxu0 0
        %953 = vmatpush1.bf16.xpose.msra.mxu0 %v905
        %954 = vmatprep.subr.bf16.mxu0 0
        %955 = vmatpush1.bf16.xpose.msra.mxu0 %v908
        %956 = vmatprep.subr.bf16.mxu0 0
        %957 = vmatpush1.bf16.xpose.msra.mxu0 %v911
        %958 = vmatprep.subr.bf16.mxu0 0
        %959 = vmatpush1.bf16.xpose.msra.mxu0 %v914
        %960 = vmatprep.subr.bf16.mxu0 0
        %961 = vmatpush1.bf16.xpose.msra.mxu0 %v917
        %962 = vmatprep.subr.bf16.mxu0 0
        %963 = vmatpush1.bf16.xpose.msra.mxu0 %v920
        %964 = vmatprep.subr.bf16.mxu0 0
        %965 = vmatpush1.bf16.xpose.msra.mxu0 %v923
        %966 = vmatprep.subr.bf16.mxu0 0
        %967 = vmatpush1.bf16.xpose.msra.mxu0 %v926
        %968 = vmatprep.subr.bf16.mxu0 0
        %969 = vmatpush1.bf16.xpose.msra.mxu0 %v929
        %970 = vmatprep.subr.bf16.mxu0 0
        %971 = vmatpush1.bf16.xpose.msra.mxu0 %v932
        %972 = vmatprep.subr.bf16.mxu0 0
        %973 = vmatpush1.bf16.xpose.msra.mxu0 %v935
        %974 = vmatprep.subr.bf16.mxu0 0
        %975 = vmatpush1.bf16.xpose.msra.mxu0 %v938
        %976 = vmatprep.subr.bf16.mxu0 0
        %977 = vmatpush1.bf16.xpose.msra.mxu0 %v941
        %978 = vmatprep.subr.bf16.mxu0 0
        %979 = vmatpush1.bf16.xpose.msra.mxu0 %v944
        %980 = vmatprep.subr.bf16.mxu0 0
        %981 = vmatpush1.bf16.xpose.msra.mxu0 %v947
        %982 = vmatprep.subr.bf16.mxu0 0
        %983 = vmatpush1.bf16.xpose.msra.mxu0 %v950
        %984 = vmatprep.mubr.bf16.mxu0 0
        %985 = vmatmul.mubr.bf16.gmra.mrb[0].mxu0 %v857
        %v986 = vpop.f32.mrb[0].mxu0
        %v987 = vadd.f32 0.0, %v986
        %v988 = vpop.f32.mrb[0].mxu0
        %v989 = vadd.f32 0.0, %v988
        %v990 = vpop.f32.mrb[0].mxu0
        %v991 = vadd.f32 0.0, %v990
        %v992 = vpop.f32.mrb[0].mxu0
        %v993 = vadd.f32 0.0, %v992
        %994 = vmatprep.mubr.bf16.mxu0 0
        %995 = vmatmul.mubr.bf16.gmra.mrb[0].mxu0 %v860
        %v996 = vpop.f32.mrb[0].mxu0
        %v997 = vadd.f32 0.0, %v996
        %v998 = vpop.f32.mrb[0].mxu0
        %v999 = vadd.f32 0.0, %v998
        %v1000 = vpop.f32.mrb[0].mxu0
        %v1001 = vadd.f32 0.0, %v1000
        %v1002 = vpop.f32.mrb[0].mxu0
        %v1003 = vadd.f32 0.0, %v1002
        %1004 = vmatprep.mubr.bf16.mxu0 0
        %1005 = vmatmul.mubr.bf16.gmra.mrb[0].mxu0 %v863
        %v1006 = vpop.f32.mrb[0].mxu0
        %v1007 = vadd.f32 0.0, %v1006
        %v1008 = vpop.f32.mrb[0].mxu0
        %v1009 = vadd.f32 0.0, %v1008
        %v1010 = vpop.f32.mrb[0].mxu0
        %v1011 = vadd.f32 0.0, %v1010
        %v1012 = vpop.f32.mrb[0].mxu0
        %v1013 = vadd.f32 0.0, %v1012
        %1014 = vmatprep.mubr.bf16.mxu0 0
        %1015 = vmatmul.mubr.bf16.gmra.mrb[0].mxu0 %v866
        %v1016 = vpop.f32.mrb[0].mxu0
        %v1017 = vadd.f32 0.0, %v1016
        %v1018 = vpop.f32.mrb[0].mxu0
        %v1019 = vadd.f32 0.0, %v1018
        %v1020 = vpop.f32.mrb[0].mxu0
        %v1021 = vadd.f32 0.0, %v1020
        %v1022 = vpop.f32.mrb[0].mxu0
        %v1023 = vadd.f32 0.0, %v1022
        %1024 = vmatprep.mubr.bf16.mxu0 0
        %1025 = vmatmul.mubr.bf16.gmra.mrb[0].mxu0 %v869
        %v1026 = vpop.f32.mrb[0].mxu0
        %v1027 = vadd.f32 0.0, %v1026
        %v1028 = vpop.f32.mrb[0].mxu0
        %v1029 = vadd.f32 0.0, %v1028
        %v1030 = vpop.f32.mrb[0].mxu0
        %v1031 = vadd.f32 0.0, %v1030
        %v1032 = vpop.f32.mrb[0].mxu0
        %v1033 = vadd.f32 0.0, %v1032
        %1034 = vmatprep.mubr.bf16.mxu0 0
        %1035 = vmatmul.mubr.bf16.gmra.mrb[0].mxu0 %v872
        %v1036 = vpop.f32.mrb[0].mxu0
        %v1037 = vadd.f32 0.0, %v1036
        %v1038 = vpop.f32.mrb[0].mxu0
        %v1039 = vadd.f32 0.0, %v1038
        %v1040 = vpop.f32.mrb[0].mxu0
        %v1041 = vadd.f32 0.0, %v1040
        %v1042 = vpop.f32.mrb[0].mxu0
        %v1043 = vadd.f32 0.0, %v1042
        %1044 = vmatprep.mubr.bf16.mxu0 0
        %1045 = vmatmul.mubr.bf16.gmra.mrb[0].mxu0 %v875
        %v1046 = vpop.f32.mrb[0].mxu0
        %v1047 = vadd.f32 0.0, %v1046
        %v1048 = vpop.f32.mrb[0].mxu0
        %v1049 = vadd.f32 0.0, %v1048
        %v1050 = vpop.f32.mrb[0].mxu0
        %v1051 = vadd.f32 0.0, %v1050
        %v1052 = vpop.f32.mrb[0].mxu0
        %v1053 = vadd.f32 0.0, %v1052
        %1054 = vmatprep.mubr.bf16.mxu0 0
        %1055 = vmatmul.mubr.bf16.gmra.mrb[0].mxu0 %v878
        %v1056 = vpop.f32.mrb[0].mxu0
        %v1057 = vadd.f32 0.0, %v1056
        %v1058 = vpop.f32.mrb[0].mxu0
        %v1059 = vadd.f32 0.0, %v1058
        %v1060 = vpop.f32.mrb[0].mxu0
        %v1061 = vadd.f32 0.0, %v1060
        %v1062 = vpop.f32.mrb[0].mxu0
        %v1063 = vadd.f32 0.0, %v1062
        %1064 = vmatprep.mubr.bf16.mxu0 0
        %1065 = vmatmul.mubr.bf16.gmra.mrb[0].mxu0 %v881
        %v1066 = vpop.f32.mrb[0].mxu0
        %v1067 = vadd.f32 0.0, %v1066
        %v1068 = vpop.f32.mrb[0].mxu0
        %v1069 = vadd.f32 0.0, %v1068
        %v1070 = vpop.f32.mrb[0].mxu0
        %v1071 = vadd.f32 0.0, %v1070
        %v1072 = vpop.f32.mrb[0].mxu0
        %v1073 = vadd.f32 0.0, %v1072
        %1074 = vmatprep.mubr.bf16.mxu0 0
        %1075 = vmatmul.mubr.bf16.gmra.mrb[0].mxu0 %v884
        %v1076 = vpop.f32.mrb[0].mxu0
        %v1077 = vadd.f32 0.0, %v1076
        %v1078 = vpop.f32.mrb[0].mxu0
        %v1079 = vadd.f32 0.0, %v1078
        %v1080 = vpop.f32.mrb[0].mxu0
        %v1081 = vadd.f32 0.0, %v1080
        %v1082 = vpop.f32.mrb[0].mxu0
        %v1083 = vadd.f32 0.0, %v1082
        %1084 = vmatprep.mubr.bf16.mxu0 0
        %1085 = vmatmul.mubr.bf16.gmra.mrb[0].mxu0 %v887
        %v1086 = vpop.f32.mrb[0].mxu0
        %v1087 = vadd.f32 0.0, %v1086
        %v1088 = vpop.f32.mrb[0].mxu0
        %v1089 = vadd.f32 0.0, %v1088
        %v1090 = vpop.f32.mrb[0].mxu0
        %v1091 = vadd.f32 0.0, %v1090
        %v1092 = vpop.f32.mrb[0].mxu0
        %v1093 = vadd.f32 0.0, %v1092
        %1094 = vmatprep.mubr.bf16.mxu0 0
        %1095 = vmatmul.mubr.bf16.gmra.mrb[0].mxu0 %v890
        %v1096 = vpop.f32.mrb[0].mxu0
        %v1097 = vadd.f32 0.0, %v1096
        %v1098 = vpop.f32.mrb[0].mxu0
        %v1099 = vadd.f32 0.0, %v1098
        %v1100 = vpop.f32.mrb[0].mxu0
        %v1101 = vadd.f32 0.0, %v1100
        %v1102 = vpop.f32.mrb[0].mxu0
        %v1103 = vadd.f32 0.0, %v1102
        %1104 = vmatprep.mubr.bf16.mxu0 0
        %1105 = vmatmul.mubr.bf16.gmra.mrb[0].mxu0 %v893
        %v1106 = vpop.f32.mrb[0].mxu0
        %v1107 = vadd.f32 0.0, %v1106
        %v1108 = vpop.f32.mrb[0].mxu0
        %v1109 = vadd.f32 0.0, %v1108
        %v1110 = vpop.f32.mrb[0].mxu0
        %v1111 = vadd.f32 0.0, %v1110
        %v1112 = vpop.f32.mrb[0].mxu0
        %v1113 = vadd.f32 0.0, %v1112
        %1114 = vmatprep.mubr.bf16.mxu0 0
        %1115 = vmatmul.mubr.bf16.gmra.mrb[0].mxu0 %v896
        %v1116 = vpop.f32.mrb[0].mxu0
        %v1117 = vadd.f32 0.0, %v1116
        %v1118 = vpop.f32.mrb[0].mxu0
        %v1119 = vadd.f32 0.0, %v1118
        %v1120 = vpop.f32.mrb[0].mxu0
        %v1121 = vadd.f32 0.0, %v1120
        %v1122 = vpop.f32.mrb[0].mxu0
        %v1123 = vadd.f32 0.0, %v1122
        %1124 = vmatprep.mubr.bf16.mxu0 0
        %1125 = vmatmul.mubr.bf16.gmra.mrb[0].mxu0 %v899
        %v1126 = vpop.f32.mrb[0].mxu0
        %v1127 = vadd.f32 0.0, %v1126
        %v1128 = vpop.f32.mrb[0].mxu0
        %v1129 = vadd.f32 0.0, %v1128
        %v1130 = vpop.f32.mrb[0].mxu0
        %v1131 = vadd.f32 0.0, %v1130
        %v1132 = vpop.f32.mrb[0].mxu0
        %v1133 = vadd.f32 0.0, %v1132
        %1134 = vmatprep.mubr.bf16.mxu0 0
        %1135 = vmatmul.mubr.bf16.gmra.mrb[0].mxu0 %v902
        %v1136 = vpop.f32.mrb[0].mxu0
        %v1137 = vadd.f32 0.0, %v1136
        %v1138 = vpop.f32.mrb[0].mxu0
        %v1139 = vadd.f32 0.0, %v1138
        %v1140 = vpop.f32.mrb[0].mxu0
        %v1141 = vadd.f32 0.0, %v1140
        %v1142 = vpop.f32.mrb[0].mxu0
        %v1143 = vadd.f32 0.0, %v1142
        %1144 = vdwg.mxu0
        %v1145 = vmax.f32 %v987, %v989
        %1146 = vmax.xlane.f32.xlu0 %v1145
        %v1147 = vpop.xlane.xlu0 %1146
        %v1148 = vmax.f32 %v991, %v993
        %1149 = vmax.xlane.f32.xlu0 %v1148
        %v1150 = vpop.xlane.xlu0 %1149
        %v1151 = vmax.f32 %v997, %v999
        %1152 = vmax.xlane.f32.xlu0 %v1151
        %v1153 = vpop.xlane.xlu0 %1152
        %v1154 = vmax.f32 %v1001, %v1003
        %1155 = vmax.xlane.f32.xlu0 %v1154
        %v1156 = vpop.xlane.xlu0 %1155
        %v1157 = vmax.f32 %v1007, %v1009
        %1158 = vmax.xlane.f32.xlu0 %v1157
        %v1159 = vpop.xlane.xlu0 %1158
        %v1160 = vmax.f32 %v1011, %v1013
        %1161 = vmax.xlane.f32.xlu0 %v1160
        %v1162 = vpop.xlane.xlu0 %1161
        %v1163 = vmax.f32 %v1017, %v1019
        %1164 = vmax.xlane.f32.xlu0 %v1163
        %v1165 = vpop.xlane.xlu0 %1164
        %v1166 = vmax.f32 %v1021, %v1023
        %1167 = vmax.xlane.f32.xlu0 %v1166
        %v1168 = vpop.xlane.xlu0 %1167
        %v1169 = vmax.f32 %v1027, %v1029
        %1170 = vmax.xlane.f32.xlu0 %v1169
        %v1171 = vpop.xlane.xlu0 %1170
        %v1172 = vmax.f32 %v1031, %v1033
        %1173 = vmax.xlane.f32.xlu0 %v1172
        %v1174 = vpop.xlane.xlu0 %1173
        %v1175 = vmax.f32 %v1037, %v1039
        %1176 = vmax.xlane.f32.xlu0 %v1175
        %v1177 = vpop.xlane.xlu0 %1176
        %v1178 = vmax.f32 %v1041, %v1043
        %1179 = vmax.xlane.f32.xlu0 %v1178
        %v1180 = vpop.xlane.xlu0 %1179
        %v1181 = vmax.f32 %v1047, %v1049
        %1182 = vmax.xlane.f32.xlu0 %v1181
        %v1183 = vpop.xlane.xlu0 %1182
        %v1184 = vmax.f32 %v1051, %v1053
        %1185 = vmax.xlane.f32.xlu0 %v1184
        %v1186 = vpop.xlane.xlu0 %1185
        %v1187 = vmax.f32 %v1057, %v1059
        %1188 = vmax.xlane.f32.xlu0 %v1187
        %v1189 = vpop.xlane.xlu0 %1188
        %v1190 = vmax.f32 %v1061, %v1063
        %1191 = vmax.xlane.f32.xlu0 %v1190
        %v1192 = vpop.xlane.xlu0 %1191
        %v1193 = vmax.f32 %v1067, %v1069
        %1194 = vmax.xlane.f32.xlu0 %v1193
        %v1195 = vpop.xlane.xlu0 %1194
        %v1196 = vmax.f32 %v1071, %v1073
        %1197 = vmax.xlane.f32.xlu0 %v1196
        %v1198 = vpop.xlane.xlu0 %1197
        %v1199 = vmax.f32 %v1077, %v1079
        %1200 = vmax.xlane.f32.xlu0 %v1199
        %v1201 = vpop.xlane.xlu0 %1200
        %v1202 = vmax.f32 %v1081, %v1083
        %1203 = vmax.xlane.f32.xlu0 %v1202
        %v1204 = vpop.xlane.xlu0 %1203
        %v1205 = vmax.f32 %v1087, %v1089
        %1206 = vmax.xlane.f32.xlu0 %v1205
        %v1207 = vpop.xlane.xlu0 %1206
        %v1208 = vmax.f32 %v1091, %v1093
        %1209 = vmax.xlane.f32.xlu0 %v1208
        %v1210 = vpop.xlane.xlu0 %1209
        %v1211 = vmax.f32 %v1097, %v1099
        %1212 = vmax.xlane.f32.xlu0 %v1211
        %v1213 = vpop.xlane.xlu0 %1212
        %v1214 = vmax.f32 %v1101, %v1103
        %1215 = vmax.xlane.f32.xlu0 %v1214
        %v1216 = vpop.xlane.xlu0 %1215
        %v1217 = vmax.f32 %v1107, %v1109
        %1218 = vmax.xlane.f32.xlu0 %v1217
        %v1219 = vpop.xlane.xlu0 %1218
        %v1220 = vmax.f32 %v1111, %v1113
        %1221 = vmax.xlane.f32.xlu0 %v1220
        %v1222 = vpop.xlane.xlu0 %1221
        %v1223 = vmax.f32 %v1117, %v1119
        %1224 = vmax.xlane.f32.xlu0 %v1223
        %v1225 = vpop.xlane.xlu0 %1224
        %v1226 = vmax.f32 %v1121, %v1123
        %1227 = vmax.xlane.f32.xlu0 %v1226
        %v1228 = vpop.xlane.xlu0 %1227
        %v1229 = vmax.f32 %v1127, %v1129
        %1230 = vmax.xlane.f32.xlu0 %v1229
        %v1231 = vpop.xlane.xlu0 %1230
        %v1232 = vmax.f32 %v1131, %v1133
        %1233 = vmax.xlane.f32.xlu0 %v1232
        %v1234 = vpop.xlane.xlu0 %1233
        %v1235 = vmax.f32 %v1137, %v1139
        %1236 = vmax.xlane.f32.xlu0 %v1235
        %v1237 = vpop.xlane.xlu0 %1236
        %v1238 = vmax.f32 %v1141, %v1143
        %1239 = vmax.xlane.f32.xlu0 %v1238
        %v1240 = vpop.xlane.xlu0 %1239
        %v1241 = vsub.f32 %v987, %v1147
        %v1242 = vsub.f32 %v989, %v1147
        %v1243 = vsub.f32 %v991, %v1150
        %v1244 = vsub.f32 %v993, %v1150
        %v1245 = vsub.f32 %v997, %v1153
        %v1246 = vsub.f32 %v999, %v1153
        %v1247 = vsub.f32 %v1001, %v1156
        %v1248 = vsub.f32 %v1003, %v1156
        %v1249 = vsub.f32 %v1007, %v1159
        %v1250 = vsub.f32 %v1009, %v1159
        %v1251 = vsub.f32 %v1011, %v1162
        %v1252 = vsub.f32 %v1013, %v1162
        %v1253 = vsub.f32 %v1017, %v1165
        %v1254 = vsub.f32 %v1019, %v1165
        %v1255 = vsub.f32 %v1021, %v1168
        %v1256 = vsub.f32 %v1023, %v1168
        %v1257 = vsub.f32 %v1027, %v1171
        %v1258 = vsub.f32 %v1029, %v1171
        %v1259 = vsub.f32 %v1031, %v1174
        %v1260 = vsub.f32 %v1033, %v1174
        %v1261 = vsub.f32 %v1037, %v1177
        %v1262 = vsub.f32 %v1039, %v1177
        %v1263 = vsub.f32 %v1041, %v1180
        %v1264 = vsub.f32 %v1043, %v1180
        %v1265 = vsub.f32 %v1047, %v1183
        %v1266 = vsub.f32 %v1049, %v1183
        %v1267 = vsub.f32 %v1051, %v1186
        %v1268 = vsub.f32 %v1053, %v1186
        %v1269 = vsub.f32 %v1057, %v1189
        %v1270 = vsub.f32 %v1059, %v1189
        %v1271 = vsub.f32 %v1061, %v1192
        %v1272 = vsub.f32 %v1063, %v1192
        %v1273 = vsub.f32 %v1067, %v1195
        %v1274 = vsub.f32 %v1069, %v1195
        %v1275 = vsub.f32 %v1071, %v1198
        %v1276 = vsub.f32 %v1073, %v1198
        %v1277 = vsub.f32 %v1077, %v1201
        %v1278 = vsub.f32 %v1079, %v1201
        %v1279 = vsub.f32 %v1081, %v1204
        %v1280 = vsub.f32 %v1083, %v1204
        %v1281 = vsub.f32 %v1087, %v1207
        %v1282 = vsub.f32 %v1089, %v1207
        %v1283 = vsub.f32 %v1091, %v1210
        %v1284 = vsub.f32 %v1093, %v1210
        %v1285 = vsub.f32 %v1097, %v1213
        %v1286 = vsub.f32 %v1099, %v1213
        %v1287 = vsub.f32 %v1101, %v1216
        %v1288 = vsub.f32 %v1103, %v1216
        %v1289 = vsub.f32 %v1107, %v1219
        %v1290 = vsub.f32 %v1109, %v1219
        %v1291 = vsub.f32 %v1111, %v1222
        %v1292 = vsub.f32 %v1113, %v1222
        %v1293 = vsub.f32 %v1117, %v1225
        %v1294 = vsub.f32 %v1119, %v1225
        %v1295 = vsub.f32 %v1121, %v1228
        %v1296 = vsub.f32 %v1123, %v1228
        %v1297 = vsub.f32 %v1127, %v1231
        %v1298 = vsub.f32 %v1129, %v1231
        %v1299 = vsub.f32 %v1131, %v1234
        %v1300 = vsub.f32 %v1133, %v1234
        %v1301 = vsub.f32 %v1137, %v1237
        %v1302 = vsub.f32 %v1139, %v1237
        %v1303 = vsub.f32 %v1141, %v1240
        %v1304 = vsub.f32 %v1143, %v1240
        %v1305 = vmul.f32 %v1241, 1.442695
        %v1306 = vpow.pop %v1305
        %v1307 = vmul.f32 %v1242, 1.442695
        %v1308 = vpow.pop %v1307
        %v1309 = vmul.f32 %v1243, 1.442695
        %v1310 = vpow.pop %v1309
        %v1311 = vmul.f32 %v1244, 1.442695
        %v1312 = vpow.pop %v1311
        %v1313 = vmul.f32 %v1245, 1.442695
        %v1314 = vpow.pop %v1313
        %v1315 = vmul.f32 %v1246, 1.442695
        %v1316 = vpow.pop %v1315
        %v1317 = vmul.f32 %v1247, 1.442695
        %v1318 = vpow.pop %v1317
        %v1319 = vmul.f32 %v1248, 1.442695
        %v1320 = vpow.pop %v1319
        %v1321 = vmul.f32 %v1249, 1.442695
        %v1322 = vpow.pop %v1321
        %v1323 = vmul.f32 %v1250, 1.442695
        %v1324 = vpow.pop %v1323
        %v1325 = vmul.f32 %v1251, 1.442695
        %v1326 = vpow.pop %v1325
        %v1327 = vmul.f32 %v1252, 1.442695
        %v1328 = vpow.pop %v1327
        %v1329 = vmul.f32 %v1253, 1.442695
        %v1330 = vpow.pop %v1329
        %v1331 = vmul.f32 %v1254, 1.442695
        %v1332 = vpow.pop %v1331
        %v1333 = vmul.f32 %v1255, 1.442695
        %v1334 = vpow.pop %v1333
        %v1335 = vmul.f32 %v1256, 1.442695
        %v1336 = vpow.pop %v1335
        %v1337 = vmul.f32 %v1257, 1.442695
        %v1338 = vpow.pop %v1337
        %v1339 = vmul.f32 %v1258, 1.442695
        %v1340 = vpow.pop %v1339
        %v1341 = vmul.f32 %v1259, 1.442695
        %v1342 = vpow.pop %v1341
        %v1343 = vmul.f32 %v1260, 1.442695
        %v1344 = vpow.pop %v1343
        %v1345 = vmul.f32 %v1261, 1.442695
        %v1346 = vpow.pop %v1345
        %v1347 = vmul.f32 %v1262, 1.442695
        %v1348 = vpow.pop %v1347
        %v1349 = vmul.f32 %v1263, 1.442695
        %v1350 = vpow.pop %v1349
        %v1351 = vmul.f32 %v1264, 1.442695
        %v1352 = vpow.pop %v1351
        %v1353 = vmul.f32 %v1265, 1.442695
        %v1354 = vpow.pop %v1353
        %v1355 = vmul.f32 %v1266, 1.442695
        %v1356 = vpow.pop %v1355
        %v1357 = vmul.f32 %v1267, 1.442695
        %v1358 = vpow.pop %v1357
        %v1359 = vmul.f32 %v1268, 1.442695
        %v1360 = vpow.pop %v1359
        %v1361 = vmul.f32 %v1269, 1.442695
        %v1362 = vpow.pop %v1361
        %v1363 = vmul.f32 %v1270, 1.442695
        %v1364 = vpow.pop %v1363
        %v1365 = vmul.f32 %v1271, 1.442695
        %v1366 = vpow.pop %v1365
        %v1367 = vmul.f32 %v1272, 1.442695
        %v1368 = vpow.pop %v1367
        %v1369 = vmul.f32 %v1273, 1.442695
        %v1370 = vpow.pop %v1369
        %v1371 = vmul.f32 %v1274, 1.442695
        %v1372 = vpow.pop %v1371
        %v1373 = vmul.f32 %v1275, 1.442695
        %v1374 = vpow.pop %v1373
        %v1375 = vmul.f32 %v1276, 1.442695
        %v1376 = vpow.pop %v1375
        %v1377 = vmul.f32 %v1277, 1.442695
        %v1378 = vpow.pop %v1377
        %v1379 = vmul.f32 %v1278, 1.442695
        %v1380 = vpow.pop %v1379
        %v1381 = vmul.f32 %v1279, 1.442695
        %v1382 = vpow.pop %v1381
        %v1383 = vmul.f32 %v1280, 1.442695
        %v1384 = vpow.pop %v1383
        %v1385 = vmul.f32 %v1281, 1.442695
        %v1386 = vpow.pop %v1385
        %v1387 = vmul.f32 %v1282, 1.442695
        %v1388 = vpow.pop %v1387
        %v1389 = vmul.f32 %v1283, 1.442695
        %v1390 = vpow.pop %v1389
        %v1391 = vmul.f32 %v1284, 1.442695
        %v1392 = vpow.pop %v1391
        %v1393 = vmul.f32 %v1285, 1.442695
        %v1394 = vpow.pop %v1393
        %v1395 = vmul.f32 %v1286, 1.442695
        %v1396 = vpow.pop %v1395
        %v1397 = vmul.f32 %v1287, 1.442695
        %v1398 = vpow.pop %v1397
        %v1399 = vmul.f32 %v1288, 1.442695
        %v1400 = vpow.pop %v1399
        %v1401 = vmul.f32 %v1289, 1.442695
        %v1402 = vpow.pop %v1401
        %v1403 = vmul.f32 %v1290, 1.442695
        %v1404 = vpow.pop %v1403
        %v1405 = vmul.f32 %v1291, 1.442695
        %v1406 = vpow.pop %v1405
        %v1407 = vmul.f32 %v1292, 1.442695
        %v1408 = vpow.pop %v1407
        %v1409 = vmul.f32 %v1293, 1.442695
        %v1410 = vpow.pop %v1409
        %v1411 = vmul.f32 %v1294, 1.442695
        %v1412 = vpow.pop %v1411
        %v1413 = vmul.f32 %v1295, 1.442695
        %v1414 = vpow.pop %v1413
        %v1415 = vmul.f32 %v1296, 1.442695
        %v1416 = vpow.pop %v1415
        %v1417 = vmul.f32 %v1297, 1.442695
        %v1418 = vpow.pop %v1417
        %v1419 = vmul.f32 %v1298, 1.442695
        %v1420 = vpow.pop %v1419
        %v1421 = vmul.f32 %v1299, 1.442695
        %v1422 = vpow.pop %v1421
        %v1423 = vmul.f32 %v1300, 1.442695
        %v1424 = vpow.pop %v1423
        %v1425 = vmul.f32 %v1301, 1.442695
        %v1426 = vpow.pop %v1425
        %v1427 = vmul.f32 %v1302, 1.442695
        %v1428 = vpow.pop %v1427
        %v1429 = vmul.f32 %v1303, 1.442695
        %v1430 = vpow.pop %v1429
        %v1431 = vmul.f32 %v1304, 1.442695
        %v1432 = vpow.pop %v1431
        %v1433 = vadd.f32 %v1306, %v1308
        %1434 = vadd.xlane.f32.xlu0 %v1433
        %v1435 = vpop.xlane.xlu0 %1434
        %v1436 = vadd.f32 %v1310, %v1312
        %1437 = vadd.xlane.f32.xlu0 %v1436
        %v1438 = vpop.xlane.xlu0 %1437
        %v1439 = vadd.f32 %v1314, %v1316
        %1440 = vadd.xlane.f32.xlu0 %v1439
        %v1441 = vpop.xlane.xlu0 %1440
        %v1442 = vadd.f32 %v1318, %v1320
        %1443 = vadd.xlane.f32.xlu0 %v1442
        %v1444 = vpop.xlane.xlu0 %1443
        %v1445 = vadd.f32 %v1322, %v1324
        %1446 = vadd.xlane.f32.xlu0 %v1445
        %v1447 = vpop.xlane.xlu0 %1446
        %v1448 = vadd.f32 %v1326, %v1328
        %1449 = vadd.xlane.f32.xlu0 %v1448
        %v1450 = vpop.xlane.xlu0 %1449
        %v1451 = vadd.f32 %v1330, %v1332
        %1452 = vadd.xlane.f32.xlu0 %v1451
        %v1453 = vpop.xlane.xlu0 %1452
        %v1454 = vadd.f32 %v1334, %v1336
        %1455 = vadd.xlane.f32.xlu0 %v1454
        %v1456 = vpop.xlane.xlu0 %1455
        %v1457 = vadd.f32 %v1338, %v1340
        %1458 = vadd.xlane.f32.xlu0 %v1457
        %v1459 = vpop.xlane.xlu0 %1458
        %v1460 = vadd.f32 %v1342, %v1344
        %1461 = vadd.xlane.f32.xlu0 %v1460
        %v1462 = vpop.xlane.xlu0 %1461
        %v1463 = vadd.f32 %v1346, %v1348
        %1464 = vadd.xlane.f32.xlu0 %v1463
        %v1465 = vpop.xlane.xlu0 %1464
        %v1466 = vadd.f32 %v1350, %v1352
        %1467 = vadd.xlane.f32.xlu0 %v1466
        %v1468 = vpop.xlane.xlu0 %1467
        %v1469 = vadd.f32 %v1354, %v1356
        %1470 = vadd.xlane.f32.xlu0 %v1469
        %v1471 = vpop.xlane.xlu0 %1470
        %v1472 = vadd.f32 %v1358, %v1360
        %1473 = vadd.xlane.f32.xlu0 %v1472
        %v1474 = vpop.xlane.xlu0 %1473
        %v1475 = vadd.f32 %v1362, %v1364
        %1476 = vadd.xlane.f32.xlu0 %v1475
        %v1477 = vpop.xlane.xlu0 %1476
        %v1478 = vadd.f32 %v1366, %v1368
        %1479 = vadd.xlane.f32.xlu0 %v1478
        %v1480 = vpop.xlane.xlu0 %1479
        %v1481 = vadd.f32 %v1370, %v1372
        %1482 = vadd.xlane.f32.xlu0 %v1481
        %v1483 = vpop.xlane.xlu0 %1482
        %v1484 = vadd.f32 %v1374, %v1376
        %1485 = vadd.xlane.f32.xlu0 %v1484
        %v1486 = vpop.xlane.xlu0 %1485
        %v1487 = vadd.f32 %v1378, %v1380
        %1488 = vadd.xlane.f32.xlu0 %v1487
        %v1489 = vpop.xlane.xlu0 %1488
        %v1490 = vadd.f32 %v1382, %v1384
        %1491 = vadd.xlane.f32.xlu0 %v1490
        %v1492 = vpop.xlane.xlu0 %1491
        %v1493 = vadd.f32 %v1386, %v1388
        %1494 = vadd.xlane.f32.xlu0 %v1493
        %v1495 = vpop.xlane.xlu0 %1494
        %v1496 = vadd.f32 %v1390, %v1392
        %1497 = vadd.xlane.f32.xlu0 %v1496
        %v1498 = vpop.xlane.xlu0 %1497
        %v1499 = vadd.f32 %v1394, %v1396
        %1500 = vadd.xlane.f32.xlu0 %v1499
        %v1501 = vpop.xlane.xlu0 %1500
        %v1502 = vadd.f32 %v1398, %v1400
        %1503 = vadd.xlane.f32.xlu0 %v1502
        %v1504 = vpop.xlane.xlu0 %1503
        %v1505 = vadd.f32 %v1402, %v1404
        %1506 = vadd.xlane.f32.xlu0 %v1505
        %v1507 = vpop.xlane.xlu0 %1506
        %v1508 = vadd.f32 %v1406, %v1408
        %1509 = vadd.xlane.f32.xlu0 %v1508
        %v1510 = vpop.xlane.xlu0 %1509
        %v1511 = vadd.f32 %v1410, %v1412
        %1512 = vadd.xlane.f32.xlu0 %v1511
        %v1513 = vpop.xlane.xlu0 %1512
        %v1514 = vadd.f32 %v1414, %v1416
        %1515 = vadd.xlane.f32.xlu0 %v1514
        %v1516 = vpop.xlane.xlu0 %1515
        %v1517 = vadd.f32 %v1418, %v1420
        %1518 = vadd.xlane.f32.xlu0 %v1517
        %v1519 = vpop.xlane.xlu0 %1518
        %v1520 = vadd.f32 %v1422, %v1424
        %1521 = vadd.xlane.f32.xlu0 %v1520
        %v1522 = vpop.xlane.xlu0 %1521
        %v1523 = vadd.f32 %v1426, %v1428
        %1524 = vadd.xlane.f32.xlu0 %v1523
        %v1525 = vpop.xlane.xlu0 %1524
        %v1526 = vadd.f32 %v1430, %v1432
        %1527 = vadd.xlane.f32.xlu0 %v1526
        %v1528 = vpop.xlane.xlu0 %1527
        %v1529 = vrcp.pop %v1435
        %v1530 = vrcp.pop %v1438
        %v1531 = vrcp.pop %v1441
        %v1532 = vrcp.pop %v1444
        %v1533 = vrcp.pop %v1447
        %v1534 = vrcp.pop %v1450
        %v1535 = vrcp.pop %v1453
        %v1536 = vrcp.pop %v1456
        %v1537 = vrcp.pop %v1459
        %v1538 = vrcp.pop %v1462
        %v1539 = vrcp.pop %v1465
        %v1540 = vrcp.pop %v1468
        %v1541 = vrcp.pop %v1471
        %v1542 = vrcp.pop %v1474
        %v1543 = vrcp.pop %v1477
        %v1544 = vrcp.pop %v1480
        %v1545 = vrcp.pop %v1483
        %v1546 = vrcp.pop %v1486
        %v1547 = vrcp.pop %v1489
        %v1548 = vrcp.pop %v1492
        %v1549 = vrcp.pop %v1495
        %v1550 = vrcp.pop %v1498
        %v1551 = vrcp.pop %v1501
        %v1552 = vrcp.pop %v1504
        %v1553 = vrcp.pop %v1507
        %v1554 = vrcp.pop %v1510
        %v1555 = vrcp.pop %v1513
        %v1556 = vrcp.pop %v1516
        %v1557 = vrcp.pop %v1519
        %v1558 = vrcp.pop %v1522
        %v1559 = vrcp.pop %v1525
        %v1560 = vrcp.pop %v1528
        %v1561 = vmul.f32 %v1306, %v1529
        %v1562 = vmul.f32 %v1308, %v1529
        %v1563 = vmul.f32 %v1310, %v1530
        %v1564 = vmul.f32 %v1312, %v1530
        %v1565 = vmul.f32 %v1314, %v1531
        %v1566 = vmul.f32 %v1316, %v1531
        %v1567 = vmul.f32 %v1318, %v1532
        %v1568 = vmul.f32 %v1320, %v1532
        %v1569 = vmul.f32 %v1322, %v1533
        %v1570 = vmul.f32 %v1324, %v1533
        %v1571 = vmul.f32 %v1326, %v1534
        %v1572 = vmul.f32 %v1328, %v1534
        %v1573 = vmul.f32 %v1330, %v1535
        %v1574 = vmul.f32 %v1332, %v1535
        %v1575 = vmul.f32 %v1334, %v1536
        %v1576 = vmul.f32 %v1336, %v1536
        %v1577 = vmul.f32 %v1338, %v1537
        %v1578 = vmul.f32 %v1340, %v1537
        %v1579 = vmul.f32 %v1342, %v1538
        %v1580 = vmul.f32 %v1344, %v1538
        %v1581 = vmul.f32 %v1346, %v1539
        %v1582 = vmul.f32 %v1348, %v1539
        %v1583 = vmul.f32 %v1350, %v1540
        %v1584 = vmul.f32 %v1352, %v1540
        %v1585 = vmul.f32 %v1354, %v1541
        %v1586 = vmul.f32 %v1356, %v1541
        %v1587 = vmul.f32 %v1358, %v1542
        %v1588 = vmul.f32 %v1360, %v1542
        %v1589 = vmul.f32 %v1362, %v1543
        %v1590 = vmul.f32 %v1364, %v1543
        %v1591 = vmul.f32 %v1366, %v1544
        %v1592 = vmul.f32 %v1368, %v1544
        %v1593 = vmul.f32 %v1370, %v1545
        %v1594 = vmul.f32 %v1372, %v1545
        %v1595 = vmul.f32 %v1374, %v1546
        %v1596 = vmul.f32 %v1376, %v1546
        %v1597 = vmul.f32 %v1378, %v1547
        %v1598 = vmul.f32 %v1380, %v1547
        %v1599 = vmul.f32 %v1382, %v1548
        %v1600 = vmul.f32 %v1384, %v1548
        %v1601 = vmul.f32 %v1386, %v1549
        %v1602 = vmul.f32 %v1388, %v1549
        %v1603 = vmul.f32 %v1390, %v1550
        %v1604 = vmul.f32 %v1392, %v1550
        %v1605 = vmul.f32 %v1394, %v1551
        %v1606 = vmul.f32 %v1396, %v1551
        %v1607 = vmul.f32 %v1398, %v1552
        %v1608 = vmul.f32 %v1400, %v1552
        %v1609 = vmul.f32 %v1402, %v1553
        %v1610 = vmul.f32 %v1404, %v1553
        %v1611 = vmul.f32 %v1406, %v1554
        %v1612 = vmul.f32 %v1408, %v1554
        %v1613 = vmul.f32 %v1410, %v1555
        %v1614 = vmul.f32 %v1412, %v1555
        %v1615 = vmul.f32 %v1414, %v1556
        %v1616 = vmul.f32 %v1416, %v1556
        %v1617 = vmul.f32 %v1418, %v1557
        %v1618 = vmul.f32 %v1420, %v1557
        %v1619 = vmul.f32 %v1422, %v1558
        %v1620 = vmul.f32 %v1424, %v1558
        %v1621 = vmul.f32 %v1426, %v1559
        %v1622 = vmul.f32 %v1428, %v1559
        %v1623 = vmul.f32 %v1430, %v1560
        %v1624 = vmul.f32 %v1432, %v1560
        %v1625 = vpack.c.bf16 %v1563, %v1561
        %v1626 = vpack.c.bf16 %v1564, %v1562
        %v1627 = vpack.c.bf16 %v1567, %v1565
        %v1628 = vpack.c.bf16 %v1568, %v1566
        %v1629 = vpack.c.bf16 %v1571, %v1569
        %v1630 = vpack.c.bf16 %v1572, %v1570
        %v1631 = vpack.c.bf16 %v1575, %v1573
        %v1632 = vpack.c.bf16 %v1576, %v1574
        %v1633 = vpack.c.bf16 %v1579, %v1577
        %v1634 = vpack.c.bf16 %v1580, %v1578
        %v1635 = vpack.c.bf16 %v1583, %v1581
        %v1636 = vpack.c.bf16 %v1584, %v1582
        %v1637 = vpack.c.bf16 %v1587, %v1585
        %v1638 = vpack.c.bf16 %v1588, %v1586
        %v1639 = vpack.c.bf16 %v1591, %v1589
        %v1640 = vpack.c.bf16 %v1592, %v1590
        %v1641 = vpack.c.bf16 %v1595, %v1593
        %v1642 = vpack.c.bf16 %v1596, %v1594
        %v1643 = vpack.c.bf16 %v1599, %v1597
        %v1644 = vpack.c.bf16 %v1600, %v1598
        %v1645 = vpack.c.bf16 %v1603, %v1601
        %v1646 = vpack.c.bf16 %v1604, %v1602
        %v1647 = vpack.c.bf16 %v1607, %v1605
        %v1648 = vpack.c.bf16 %v1608, %v1606
        %v1649 = vpack.c.bf16 %v1611, %v1609
        %v1650 = vpack.c.bf16 %v1612, %v1610
        %v1651 = vpack.c.bf16 %v1615, %v1613
        %v1652 = vpack.c.bf16 %v1616, %v1614
        %v1653 = vpack.c.bf16 %v1619, %v1617
        %v1654 = vpack.c.bf16 %v1620, %v1618
        %v1655 = vpack.c.bf16 %v1623, %v1621
        %v1656 = vpack.c.bf16 %v1624, %v1622
        %1657 = vmatprep.subr.bf16.mxu0 0
        %1658 = vmatpush1.bf16.msra.mxu0 %v792
        %1659 = vmatprep.subr.bf16.mxu0 0
        %1660 = vmatpush1.bf16.msra.mxu0 %v793
        %1661 = vmatprep.subr.bf16.mxu0 0
        %1662 = vmatpush1.bf16.msra.mxu0 %v794
        %1663 = vmatprep.subr.bf16.mxu0 0
        %1664 = vmatpush1.bf16.msra.mxu0 %v795
        %1665 = vmatprep.subr.bf16.mxu0 0
        %1666 = vmatpush1.bf16.msra.mxu0 %v796
        %1667 = vmatprep.subr.bf16.mxu0 0
        %1668 = vmatpush1.bf16.msra.mxu0 %v797
        %1669 = vmatprep.subr.bf16.mxu0 0
        %1670 = vmatpush1.bf16.msra.mxu0 %v798
        %1671 = vmatprep.subr.bf16.mxu0 0
        %1672 = vmatpush1.bf16.msra.mxu0 %v799
        %1673 = vmatprep.subr.bf16.mxu0 0
        %1674 = vmatpush1.bf16.msra.mxu0 %v800
        %1675 = vmatprep.subr.bf16.mxu0 0
        %1676 = vmatpush1.bf16.msra.mxu0 %v801
        %1677 = vmatprep.subr.bf16.mxu0 0
        %1678 = vmatpush1.bf16.msra.mxu0 %v802
        %1679 = vmatprep.subr.bf16.mxu0 0
        %1680 = vmatpush1.bf16.msra.mxu0 %v803
        %1681 = vmatprep.subr.bf16.mxu0 0
        %1682 = vmatpush1.bf16.msra.mxu0 %v804
        %1683 = vmatprep.subr.bf16.mxu0 0
        %1684 = vmatpush1.bf16.msra.mxu0 %v805
        %1685 = vmatprep.subr.bf16.mxu0 0
        %1686 = vmatpush1.bf16.msra.mxu0 %v806
        %1687 = vmatprep.subr.bf16.mxu0 0
        %1688 = vmatpush1.bf16.msra.mxu0 %v807
        %1689 = vmatprep.mubr.bf16.mxu0 %v1626
        %1690 = vmatmul.mubr.bf16.gmra.mrb[0].mxu0 %v1625
        %v1691 = vpop.f32.mrb[0].mxu0
        %v1692 = vadd.f32 0.0, %v1691
        %v1693 = vpop.f32.mrb[0].mxu0
        %v1694 = vpop.f32.mrb[0].mxu0
        %v1695 = vadd.f32 0.0, %v1694
        %v1696 = vpop.f32.mrb[0].mxu0
        %1697 = vmatprep.mubr.bf16.mxu0 %v1628
        %1698 = vmatmul.mubr.bf16.gmra.mrb[0].mxu0 %v1627
        %v1699 = vpop.f32.mrb[0].mxu0
        %v1700 = vadd.f32 0.0, %v1699
        %v1701 = vpop.f32.mrb[0].mxu0
        %v1702 = vpop.f32.mrb[0].mxu0
        %v1703 = vadd.f32 0.0, %v1702
        %v1704 = vpop.f32.mrb[0].mxu0
        %1705 = vmatprep.mubr.bf16.mxu0 %v1630
        %1706 = vmatmul.mubr.bf16.gmra.mrb[0].mxu0 %v1629
        %v1707 = vpop.f32.mrb[0].mxu0
        %v1708 = vadd.f32 0.0, %v1707
        %v1709 = vpop.f32.mrb[0].mxu0
        %v1710 = vpop.f32.mrb[0].mxu0
        %v1711 = vadd.f32 0.0, %v1710
        %v1712 = vpop.f32.mrb[0].mxu0
        %1713 = vmatprep.mubr.bf16.mxu0 %v1632
        %1714 = vmatmul.mubr.bf16.gmra.mrb[0].mxu0 %v1631
        %v1715 = vpop.f32.mrb[0].mxu0
        %v1716 = vadd.f32 0.0, %v1715
        %v1717 = vpop.f32.mrb[0].mxu0
        %v1718 = vpop.f32.mrb[0].mxu0
        %v1719 = vadd.f32 0.0, %v1718
        %v1720 = vpop.f32.mrb[0].mxu0
        %1721 = vmatprep.mubr.bf16.mxu0 %v1634
        %1722 = vmatmul.mubr.bf16.gmra.mrb[0].mxu0 %v1633
        %v1723 = vpop.f32.mrb[0].mxu0
        %v1724 = vadd.f32 0.0, %v1723
        %v1725 = vpop.f32.mrb[0].mxu0
        %v1726 = vpop.f32.mrb[0].mxu0
        %v1727 = vadd.f32 0.0, %v1726
        %v1728 = vpop.f32.mrb[0].mxu0
        %1729 = vmatprep.mubr.bf16.mxu0 %v1636
        %1730 = vmatmul.mubr.bf16.gmra.mrb[0].mxu0 %v1635
        %v1731 = vpop.f32.mrb[0].mxu0
        %v1732 = vadd.f32 0.0, %v1731
        %v1733 = vpop.f32.mrb[0].mxu0
        %v1734 = vpop.f32.mrb[0].mxu0
        %v1735 = vadd.f32 0.0, %v1734
        %v1736 = vpop.f32.mrb[0].mxu0
        %1737 = vmatprep.mubr.bf16.mxu0 %v1638
        %1738 = vmatmul.mubr.bf16.gmra.mrb[0].mxu0 %v1637
        %v1739 = vpop.f32.mrb[0].mxu0
        %v1740 = vadd.f32 0.0, %v1739
        %v1741 = vpop.f32.mrb[0].mxu0
        %v1742 = vpop.f32.mrb[0].mxu0
        %v1743 = vadd.f32 0.0, %v1742
        %v1744 = vpop.f32.mrb[0].mxu0
        %1745 = vmatprep.mubr.bf16.mxu0 %v1640
        %1746 = vmatmul.mubr.bf16.gmra.mrb[0].mxu0 %v1639
        %v1747 = vpop.f32.mrb[0].mxu0
        %v1748 = vadd.f32 0.0, %v1747
        %v1749 = vpop.f32.mrb[0].mxu0
        %v1750 = vpop.f32.mrb[0].mxu0
        %v1751 = vadd.f32 0.0, %v1750
        %v1752 = vpop.f32.mrb[0].mxu0
        %1753 = vmatprep.mubr.bf16.mxu0 %v1642
        %1754 = vmatmul.mubr.bf16.gmra.mrb[0].mxu0 %v1641
        %v1755 = vpop.f32.mrb[0].mxu0
        %v1756 = vadd.f32 0.0, %v1755
        %v1757 = vpop.f32.mrb[0].mxu0
        %v1758 = vpop.f32.mrb[0].mxu0
        %v1759 = vadd.f32 0.0, %v1758
        %v1760 = vpop.f32.mrb[0].mxu0
        %1761 = vmatprep.mubr.bf16.mxu0 %v1644
        %1762 = vmatmul.mubr.bf16.gmra.mrb[0].mxu0 %v1643
        %v1763 = vpop.f32.mrb[0].mxu0
        %v1764 = vadd.f32 0.0, %v1763
        %v1765 = vpop.f32.mrb[0].mxu0
        %v1766 = vpop.f32.mrb[0].mxu0
        %v1767 = vadd.f32 0.0, %v1766
        %v1768 = vpop.f32.mrb[0].mxu0
        %1769 = vmatprep.mubr.bf16.mxu0 %v1646
        %1770 = vmatmul.mubr.bf16.gmra.mrb[0].mxu0 %v1645
        %v1771 = vpop.f32.mrb[0].mxu0
        %v1772 = vadd.f32 0.0, %v1771
        %v1773 = vpop.f32.mrb[0].mxu0
        %v1774 = vpop.f32.mrb[0].mxu0
        %v1775 = vadd.f32 0.0, %v1774
        %v1776 = vpop.f32.mrb[0].mxu0
        %1777 = vmatprep.mubr.bf16.mxu0 %v1648
        %1778 = vmatmul.mubr.bf16.gmra.mrb[0].mxu0 %v1647
        %v1779 = vpop.f32.mrb[0].mxu0
        %v1780 = vadd.f32 0.0, %v1779
        %v1781 = vpop.f32.mrb[0].mxu0
        %v1782 = vpop.f32.mrb[0].mxu0
        %v1783 = vadd.f32 0.0, %v1782
        %v1784 = vpop.f32.mrb[0].mxu0
        %1785 = vmatprep.mubr.bf16.mxu0 %v1650
        %1786 = vmatmul.mubr.bf16.gmra.mrb[0].mxu0 %v1649
        %v1787 = vpop.f32.mrb[0].mxu0
        %v1788 = vadd.f32 0.0, %v1787
        %v1789 = vpop.f32.mrb[0].mxu0
        %v1790 = vpop.f32.mrb[0].mxu0
        %v1791 = vadd.f32 0.0, %v1790
        %v1792 = vpop.f32.mrb[0].mxu0
        %1793 = vmatprep.mubr.bf16.mxu0 %v1652
        %1794 = vmatmul.mubr.bf16.gmra.mrb[0].mxu0 %v1651
        %v1795 = vpop.f32.mrb[0].mxu0
        %v1796 = vadd.f32 0.0, %v1795
        %v1797 = vpop.f32.mrb[0].mxu0
        %v1798 = vpop.f32.mrb[0].mxu0
        %v1799 = vadd.f32 0.0, %v1798
        %v1800 = vpop.f32.mrb[0].mxu0
        %1801 = vmatprep.mubr.bf16.mxu0 %v1654
        %1802 = vmatmul.mubr.bf16.gmra.mrb[0].mxu0 %v1653
        %v1803 = vpop.f32.mrb[0].mxu0
        %v1804 = vadd.f32 0.0, %v1803
        %v1805 = vpop.f32.mrb[0].mxu0
        %v1806 = vpop.f32.mrb[0].mxu0
        %v1807 = vadd.f32 0.0, %v1806
        %v1808 = vpop.f32.mrb[0].mxu0
        %1809 = vmatprep.mubr.bf16.mxu0 %v1656
        %1810 = vmatmul.mubr.bf16.gmra.mrb[0].mxu0 %v1655
        %v1811 = vpop.f32.mrb[0].mxu0
        %v1812 = vadd.f32 0.0, %v1811
        %v1813 = vpop.f32.mrb[0].mxu0
        %v1814 = vpop.f32.mrb[0].mxu0
        %v1815 = vadd.f32 0.0, %v1814
        %v1816 = vpop.f32.mrb[0].mxu0
        %1817 = vdwg.mxu0
        %1818 = vst.msk [vmem:[%s163] sm:$0xff] %vm342, %v1692
        %1819 = vst.msk [vmem:[%s163 + $0x8] sm:$0xff] %vm342, %v1695
        %1820 = vst.msk [vmem:[%s163 + $0x10] sm:$0xff] %vm342, %v1700
        %1821 = vst.msk [vmem:[%s163 + $0x18] sm:$0xff] %vm342, %v1703
        %1822 = vst.msk [vmem:[%s163 + $0x20] sm:$0xff] %vm342, %v1708
        %1823 = vst.msk [vmem:[%s163 + $0x28] sm:$0xff] %vm342, %v1711
        %1824 = vst.msk [vmem:[%s163 + $0x30] sm:$0xff] %vm342, %v1716
        %1825 = vst.msk [vmem:[%s163 + $0x38] sm:$0xff] %vm342, %v1719
        %1826 = vst.msk [vmem:[%s163 + $0x40] sm:$0xff] %vm342, %v1724
        %1827 = vst.msk [vmem:[%s163 + $0x48] sm:$0xff] %vm342, %v1727
        %1828 = vst.msk [vmem:[%s163 + $0x50] sm:$0xff] %vm342, %v1732
        %1829 = vst.msk [vmem:[%s163 + $0x58] sm:$0xff] %vm342, %v1735
        %1830 = vst.msk [vmem:[%s163 + $0x60] sm:$0xff] %vm342, %v1740
        %1831 = vst.msk [vmem:[%s163 + $0x68] sm:$0xff] %vm342, %v1743
        %1832 = vst.msk [vmem:[%s163 + $0x70] sm:$0xff] %vm342, %v1748
        %1833 = vst.msk [vmem:[%s163 + $0x78] sm:$0xff] %vm342, %v1751
        %1834 = vst.msk [vmem:[%s163 + $0x80] sm:$0xff] %vm342, %v1756
        %1835 = vst.msk [vmem:[%s163 + $0x88] sm:$0xff] %vm342, %v1759
        %1836 = vst.msk [vmem:[%s163 + $0x90] sm:$0xff] %vm342, %v1764
        %1837 = vst.msk [vmem:[%s163 + $0x98] sm:$0xff] %vm342, %v1767
        %1838 = vst.msk [vmem:[%s163 + $0xa0] sm:$0xff] %vm342, %v1772
        %1839 = vst.msk [vmem:[%s163 + $0xa8] sm:$0xff] %vm342, %v1775
        %1840 = vst.msk [vmem:[%s163 + $0xb0] sm:$0xff] %vm342, %v1780
        %1841 = vst.msk [vmem:[%s163 + $0xb8] sm:$0xff] %vm342, %v1783
        %1842 = vst.msk [vmem:[%s163 + $0xc0] sm:$0xff] %vm342, %v1788
        %1843 = vst.msk [vmem:[%s163 + $0xc8] sm:$0xff] %vm342, %v1791
        %1844 = vst.msk [vmem:[%s163 + $0xd0] sm:$0xff] %vm342, %v1796
        %1845 = vst.msk [vmem:[%s163 + $0xd8] sm:$0xff] %vm342, %v1799
        %1846 = vst.msk [vmem:[%s163 + $0xe0] sm:$0xff] %vm342, %v1804
        %1847 = vst.msk [vmem:[%s163 + $0xe8] sm:$0xff] %vm342, %v1807
        %1848 = vst.msk [vmem:[%s163 + $0xf0] sm:$0xff] %vm342, %v1812
        %1849 = vst.msk [vmem:[%s163 + $0xf8] sm:$0xff] %vm342, %v1815
        %s1850 = sand.u32 %s93, 1
        %s1851 = scalar_lea.sflag [#allocation3], %s1850
        %s1852 = sand.u32 %s93, 1
        %s1853 = smul.addr %s1852, 256
        %s1854 = scalar_lea.vmem [#allocation2], %s1853
        // Predicated region
        $region33: #{_lambda_.1} parent=31 // pred_check
          %p1855 = pneg %p103
        $region34: #{_lambda_.1} parent=31 // pred_check_branch
          %1857 = sbr.rel (%p1855) target = $region36
        $region35: #{_lambda_.1} parent=31 // pred_region
          %s1859 = ssub.s32 4096, 4096
          %1860 = vsyncadd %s1851, %s1859
          %s1861 = smul.addr %s17, 32
          %s1862 = smul.addr %s1861, 128
          %s1863 = scalar_lea.hbm %s3, %s1862
          %s1864 = sshll.u32 %s1854, 4
          %s1865 = int_to_ptr.vmem [resolvable:$true] %s1864
          %1870 = dma.vmem_to_hbm [thread:$0]  %s1865, 4096, %s1863, %s1851, 128, 128, 8
        $region36: #{_lambda_.1} parent=31 // pred_fallthru
          _
      $region32: #{_lambda_.1} parent=5 // pred_fallthru
        _
      %p1871 = scmp.le.s32.totalorder 2, %s12
      // Predicated region
      $region37: #{_lambda_.1} parent=5 // pred_check
        %p1872 = pneg %p1871
      $region38: #{_lambda_.1} parent=5 // pred_check_branch
        %1874 = sbr.rel (%p1872) target = $region40
      $region39: #{_lambda_.1} parent=5 // pred_region
        %s1875 = ssub.s32 %s12, 2
        // Predicated region
        $region41: #{_lambda_.1} parent=39 // pred_check
          %p1876 = pneg %p109
        $region42: #{_lambda_.1} parent=39 // pred_check_branch
          %1878 = sbr.rel (%p1876) target = $region44
        $region43: #{_lambda_.1} parent=39 // pred_region
          %s1879 = sand.u32 %s94, 1
          %s1880 = scalar_lea.sflag [#allocation3], %s1879
          %s1881 = sand.u32 %s94, 1
          %s1882 = smul.addr %s1881, 256
          %s1883 = scalar_lea.vmem [#allocation2], %s1882
          %1884 = dma.done %s1880, 4096
        $region44: #{_lambda_.1} parent=39 // pred_fallthru
          _
      $region40: #{_lambda_.1} parent=5 // pred_fallthru
        _
    $region6: #{_lambda_.1} parent=1 // loop_footer
      %s16 = sadd.s32 1, %s12
    $region7: #{_lambda_.1} parent=1 // loop_footer_branch
      %11 = sbr.rel target = $region3
    $region8: #{_lambda_.1} parent=1 // loop_exit
      _
    %1885 = vsyncpa [#allocation3], 1
    %s1886 = scalar_lea.sflag [#allocation3], 1
    %1887 = vsyncpa %s1886, 1

</llo_original>
